<compile_context>
chip_gen: v5e
topology: v5e:2x2
jax: 0.10.0
libtpu: 0.0.40
codegen_flags: <defaults>
</compile_context>

<pallas_src>
import jax
import jax.numpy as jnp
from jax.experimental import pallas as pl
from jax.experimental.pallas import tpu as pltpu

# (in_features, out_features) for fc1..fc7
LAYER_DIMS = [
    (32 * 32 * 3, 256),
    (256, 256),
    (256, 256),
    (256, 128),
    (128, 128),
    (128, 64),
    (64, 10),
]
IN_DIM = LAYER_DIMS[0][0]          # 3072
OUT_DIM = LAYER_DIMS[-1][1]        # 10
OUT_PAD = 128                      # lane-dense padded output width
TM_MAX = 512                       # batch tile height (~85% HBM roofline)
VMEM_LIMIT_BYTES = 32 * 1024 * 1024  # covers tm=512 f32 x tiles on v5e as well


def _round_up(n, m):
    return ((n + m - 1) // m) * m


def collapse_params(params):
    """Fold the 7 activation-free Linear layers into one affine map.

    params: list of (W_(in,out), b_(1,out)) f32, nn.Linear-equivalent
    (W stored already transposed to (in, out)).

    The fold itself is done in f32; the returned W_eff is bf16 (MXU operand,
    half the HBM/VMEM), b_eff stays f32 (tiny, keeps the bias add exact).
    Output columns are zero-padded 10 -> OUT_PAD for lane-dense stores.
    """
    w_eff, b_eff = params[0]
    for w, b in params[1:]:
        b_eff = b_eff @ w + b
        w_eff = w_eff @ w
    pad = OUT_PAD - w_eff.shape[1]
    w_eff = jnp.pad(w_eff, ((0, 0), (0, pad))).astype(jnp.bfloat16)
    b_eff = jnp.pad(b_eff, ((0, 0), (0, pad))).astype(jnp.float32)
    return w_eff, b_eff


def _collapsed_kernel(x_ref, w_ref, b_ref, o_ref):
    # bf16 operands on the MXU (cast of x happens in-kernel, hides under the
    # x DMA), f32 accumulate, f32 bias add, f32 store.
    x_bf = x_ref[...].astype(jnp.bfloat16)
    acc = jnp.dot(x_bf, w_ref[...], preferred_element_type=jnp.float32)
    o_ref[...] = (acc + b_ref[...]).astype(o_ref.dtype)


def _pick_tile(B):
    """Batch tile height.

    * Small B: a single block equal to the full batch dim (block_shape ==
      array dim satisfies the (8,128) rule; no padding needed).
    * Larger B: >= 2 roughly equal, 8-aligned tiles capped at TM_MAX so both
      v7x TensorCores get work; a ragged last block is fine (masked store).
    """
    if B < 16:
        return B
    n_steps = max(pl.cdiv(B, TM_MAX), 2)
    return min(TM_MAX, _round_up(pl.cdiv(B, n_steps), 8))


def mlp_noact_forward(x, w_eff, b_eff):
    """x: (B, 3, 32, 32) f32.  (w_eff, b_eff): output of collapse_params()."""
    B = x.shape[0]
    x_flat = x.reshape(B, IN_DIM)   # same flatten order as torch .view

    tm = _pick_tile(B)
    grid = (pl.cdiv(B, tm),)        # ragged last block allowed; no jnp.pad of x

    out = pl.pallas_call(
        _collapsed_kernel,
        out_shape=jax.ShapeDtypeStruct((B, OUT_PAD), jnp.float32),
        grid_spec=pltpu.PrefetchScalarGridSpec(
            num_scalar_prefetch=0,
            grid=grid,
            in_specs=[
                pl.BlockSpec((tm, IN_DIM), lambda i: (i, 0)),       # x: batch-tiled, pipelined
                pl.BlockSpec((IN_DIM, OUT_PAD), lambda i: (0, 0)),  # W_eff (bf16): VMEM-resident
                pl.BlockSpec((1, OUT_PAD), lambda i: (0, 0)),       # b_eff (f32): VMEM-resident
            ],
            out_specs=pl.BlockSpec((tm, OUT_PAD), lambda i: (i, 0)),
        ),
        compiler_params=pltpu.CompilerParams(
            dimension_semantics=("parallel",),      # shard batch across v7x's 2 TCs
            vmem_limit_bytes=VMEM_LIMIT_BYTES,      # v5e's 16 MiB default too tight at tm=512
        ),
    )(x_flat, w_eff, b_eff)
    return out[:, :OUT_DIM]


def init_params(key):
    """Deterministic init mimicking nn.Linear's uniform(-1/sqrt(in), 1/sqrt(in))."""
    params = []
    for (fan_in, fan_out) in LAYER_DIMS:
        key, kw, kb = jax.random.split(key, 3)
        bound = 1.0 / jnp.sqrt(jnp.float32(fan_in))
        w = jax.random.uniform(kw, (fan_in, fan_out), jnp.float32,
                               minval=-bound, maxval=bound)   # stored (in, out)
        b = jax.random.uniform(kb, (1, fan_out), jnp.float32,
                               minval=-bound, maxval=bound)
        params.append((w, b))
    return params


def reference_forward(x, params):
    """Pure-JAX per-layer f32 reference (matches the PyTorch forward layer-by-layer)."""
    h = x.reshape(x.shape[0], -1)
    for w, b in params:
        h = h @ w + b
    return h


if __name__ == "__main__":
    key = jax.random.PRNGKey(0)
    key, kx = jax.random.split(key)

    # Module-consistent input: batch=2, NCHW = (2, 3, 32, 32)
    x = jax.random.normal(kx, (2, 3, 32, 32), jnp.float32)
    params = init_params(key)

    # One-time parameter folding (the activation-free net is a single affine map).
    w_eff, b_eff = collapse_params(params)

    y = mlp_noact_forward(x, w_eff, b_eff)
    y = jax.block_until_ready(y)

    y_ref = reference_forward(x, params)
    assert y.shape == (2, OUT_DIM), y.shape
    # Folding changes rounding order and the bf16 MXU operands add ~1e-3 level
    # drift vs the f32 per-layer reference; realistic error is ~1e-4-1e-3.
    max_err = float(jnp.max(jnp.abs(y - y_ref)))
    assert jnp.allclose(y, y_ref, atol=2e-2, rtol=2e-2), (
        "mismatch vs reference, max abs err %.3e" % max_err)

    print("KERNEL_OK")
</pallas_src>

<mosaic_0001>
module attributes {stable_mosaic.version = 11 : i64} {
  func.func @_collapsed_kernel(%arg0: i32, %arg1: memref<2x3072xf32, #tpu.memory_space<vmem>>, %arg2: memref<3072x128xbf16, #tpu.memory_space<vmem>>, %arg3: memref<1x128xf32, #tpu.memory_space<vmem>>, %arg4: memref<2x128xf32, #tpu.memory_space<vmem>>) attributes {dimension_semantics = [#tpu.dimension_semantics<parallel>], iteration_bounds = array<i64: 1>, scalar_prefetch = 0 : i64, scratch_operands = 0 : i64, tpu.core_type = #tpu.core_type<tc>, window_params = [{transform_indices = @transform_0, window_bounds = array<i64: 2, 3072>}, {pipeline_mode = #tpu.pipeline_mode<synchronous>, transform_indices = @transform_1, window_bounds = array<i64: 3072, 128>}, {pipeline_mode = #tpu.pipeline_mode<synchronous>, transform_indices = @transform_2, window_bounds = array<i64: 1, 128>}, {transform_indices = @transform_3, window_bounds = array<i64: 2, 128>}]} {
    %c0 = arith.constant 0 : index
    %c0_0 = arith.constant 0 : index
    %0 = vector.load %arg1[%c0, %c0_0] : memref<2x3072xf32, #tpu.memory_space<vmem>>, vector<2x3072xf32>
    %1 = arith.truncf %0 : vector<2x3072xf32> to vector<2x3072xbf16>
    %c0_1 = arith.constant 0 : index
    %c0_2 = arith.constant 0 : index
    %2 = vector.load %arg2[%c0_1, %c0_2] : memref<3072x128xbf16, #tpu.memory_space<vmem>>, vector<3072x128xbf16>
    %cst = arith.constant dense<0.000000e+00> : vector<2x128xf32>
    %3 = tpu.matmul %1, %2, %cst {dimension_numbers = #tpu.dot_dimension_numbers<[1], [0], [0], [1], [0, 0, 1, 1], [], []>} : vector<2x3072xbf16>, vector<3072x128xbf16>, vector<2x128xf32> -> vector<2x128xf32>
    %c0_3 = arith.constant 0 : index
    %c0_4 = arith.constant 0 : index
    %4 = vector.load %arg3[%c0_3, %c0_4] : memref<1x128xf32, #tpu.memory_space<vmem>>, vector<1x128xf32>
    %5 = vector.broadcast %4 : vector<1x128xf32> to vector<2x128xf32>
    %6 = arith.addf %3, %5 : vector<2x128xf32>
    %c0_5 = arith.constant 0 : index
    %c0_6 = arith.constant 0 : index
    %7 = vector.load %arg4[%c0_5, %c0_6] : memref<2x128xf32, #tpu.memory_space<vmem>>, vector<2x128xf32>
    tpu.vector_store %arg4[%c0_5, %c0_6], %6 {strides = array<i32>} : memref<2x128xf32, #tpu.memory_space<vmem>>, vector<2x128xf32>,
    return
  }
  func.func @transform_0(%arg0: i32) -> (i32, i32) {
    %c0_i32 = arith.constant 0 : i32
    %c0_i32_0 = arith.constant 0 : i32
    return %arg0, %c0_i32 : i32, i32
  }
  func.func @transform_1(%arg0: i32) -> (i32, i32) {
    %c0_i32 = arith.constant 0 : i32
    %c0_i32_0 = arith.constant 0 : i32
    %c0_i32_1 = arith.constant 0 : i32
    return %c0_i32, %c0_i32_0 : i32, i32
  }
  func.func @transform_2(%arg0: i32) -> (i32, i32) {
    %c0_i32 = arith.constant 0 : i32
    %c0_i32_0 = arith.constant 0 : i32
    %c0_i32_1 = arith.constant 0 : i32
    return %c0_i32, %c0_i32_0 : i32, i32
  }
  func.func @transform_3(%arg0: i32) -> (i32, i32) {
    %c0_i32 = arith.constant 0 : i32
    %c0_i32_0 = arith.constant 0 : i32
    return %arg0, %c0_i32 : i32, i32
  }
}

</mosaic_0001>

<llo_original>
// kernel: tpu_custom_call.1
$region0: #{tpu_custom_call.1}
  #allocation0 [shape = 'u32[]', space=smem, size = 0x4, offset = 0x4, fixed_abs, tag = 'smem constant byte address 0x4 - core index']
  #allocation1 [shape = 'u32[72,128]{1,0:T(1,128)}', space=vmem, size = 0x9000, scoped, tag = 'internal scratch']
  %s0 = inlined_call_operand.hbm [shape: f32[2,3072], index: 0, kind: input, shape index: {}]
  %s1 = inlined_call_operand.hbm [shape: bf16[3072,128], index: 1, kind: input, shape index: {}]
  %s2 = inlined_call_operand.vmem [shape: f32[1,128], index: 2, kind: input, shape index: {}]
  %s3 = inlined_call_operand.hbm [shape: f32[2,128], index: 3, kind: output, shape index: {}]
  %s4 = sld [smem:[#allocation0]]
  $region30: #{tpu_custom_call.1} parent=0
    _
  %s6 = ssub.s32 1, %s4
  %s7 = scalar_select 0, %s6, %s4
  $region1: #{tpu_custom_call.1} parent=0
    #allocation2 [shape = 'u8[24576]{0}', space=vmem, size = 0x6000, scoped, tag = 'input window, operand 0, single buffered']
    #allocation3 [shape = 's32[1]{0}', space=sflag, size = 0x4, scoped, tag = 'scoped memory for tpu_custom_call.1']
    #allocation4 [shape = 's32[1]{0}', space=sflag, size = 0x4, scoped, tag = 'scoped memory for tpu_custom_call.1']
    #allocation5 [shape = 'u8[786432]{0}', space=vmem, size = 0xc0000, scoped, tag = 'input window, operand 1, single buffered']
    #allocation6 [shape = 's32[1]{0}', space=sflag, size = 0x4, scoped, tag = 'scoped memory for tpu_custom_call.1']
    #allocation7 [shape = 'u8[1024]{0}', space=vmem, size = 0x400, scoped, tag = 'output window, operand 0, single buffered']
    %8 = vsyncpa [#allocation3], 0
    %9 = vsyncpa [#allocation6], 0
    %10 = vsyncpa [#allocation4], 0
    // Predicated region
    $region2: #{tpu_custom_call.1} parent=1 // pred_check
      _
    $region3: #{tpu_custom_call.1} parent=1 // pred_check_branch
      %12 = sbr.rel (0) target = $region5
    $region4: #{tpu_custom_call.1} parent=1 // pred_region
      %14 = vsyncadd [#allocation3], 0
      %s16 = sshll.u32 %s0, 4
      %s17 = int_to_ptr.hbm [resolvable:$true] %s16
      %s18 = sshll.u32 [#allocation2], 4
      %s19 = int_to_ptr.vmem [resolvable:$true] %s18
      %21 = dma.hbm_to_vmem [thread:$0]  %s17, 768, %s19, [#allocation3]
    $region5: #{tpu_custom_call.1} parent=1 // pred_fallthru
      _
    // Predicated region
    $region6: #{tpu_custom_call.1} parent=1 // pred_check
      _
    $region7: #{tpu_custom_call.1} parent=1 // pred_check_branch
      %23 = sbr.rel (0) target = $region9
    $region8: #{tpu_custom_call.1} parent=1 // pred_region
      %25 = vsyncadd [#allocation6], 0
      %s26 = sshll.u32 %s1, 4
      %s27 = int_to_ptr.hbm [resolvable:$true] %s26
      %s28 = sshll.u32 [#allocation5], 4
      %s29 = int_to_ptr.vmem [resolvable:$true] %s28
      %34 = dma.hbm_to_vmem [thread:$0]  %s27, 24576, %s29, [#allocation6], 64, 64, 4
    $region9: #{tpu_custom_call.1} parent=1 // pred_fallthru
      _
    // Predicated region
    $region10: #{tpu_custom_call.1} parent=1 // pred_check
      _
    $region11: #{tpu_custom_call.1} parent=1 // pred_check_branch
      %36 = sbr.rel (0) target = $region13
    $region12: #{tpu_custom_call.1} parent=1 // pred_region
      _
    $region13: #{tpu_custom_call.1} parent=1 // pred_fallthru
      _
    // Predicated region
    $region14: #{tpu_custom_call.1} parent=1 // pred_check
      _
    $region15: #{tpu_custom_call.1} parent=1 // pred_check_branch
      %38 = sbr.rel (0) target = $region17
    $region16: #{tpu_custom_call.1} parent=1 // pred_region
      %40 = dma.done [#allocation3], 768
    $region17: #{tpu_custom_call.1} parent=1 // pred_fallthru
      _
    // Predicated region
    $region18: #{tpu_custom_call.1} parent=1 // pred_check
      _
    $region19: #{tpu_custom_call.1} parent=1 // pred_check_branch
      %42 = sbr.rel (0) target = $region21
    $region20: #{tpu_custom_call.1} parent=1 // pred_region
      %44 = dma.done [#allocation6], 24576
    $region21: #{tpu_custom_call.1} parent=1 // pred_fallthru
      _
    %v45 = vld [vmem:[#allocation2] sm:$0xff]
    %v46 = vld [vmem:[#allocation2 + $0x8] sm:$0xff]
    %v47 = vld [vmem:[#allocation2 + $0x10] sm:$0xff]
    %v48 = vld [vmem:[#allocation2 + $0x18] sm:$0xff]
    %v49 = vld [vmem:[#allocation2 + $0x20] sm:$0xff]
    %v50 = vld [vmem:[#allocation2 + $0x28] sm:$0xff]
    %57 = vst [vmem:[#allocation1] ss:$4 sm:$0xff] %v45
    %s58 = scalar_lea.vmem [#allocation1], 32
    %59 = vst [vmem:[%s58] ss:$4 sm:$0xff] %v46
    %v60 = vld.sshfl [vmem:[#allocation1] sm:$0xff pattern:$0x73625140]
    %v61 = vld.sshfl [vmem:[#allocation1 + $0x8] sm:$0xff pattern:$0x73625140]
    %v62 = vld.sshfl [vmem:[#allocation1 + $0x10] sm:$0xff pattern:$0x73625140]
    %v63 = vld.sshfl [vmem:[#allocation1 + $0x18] sm:$0xff pattern:$0x73625140]
    %v64 = vld.sshfl [vmem:[#allocation1 + $0x20] sm:$0xff pattern:$0x73625140]
    %v65 = vld.sshfl [vmem:[#allocation1 + $0x28] sm:$0xff pattern:$0x73625140]
    %v66 = vld.sshfl [vmem:[#allocation1 + $0x30] sm:$0xff pattern:$0x73625140]
    %v67 = vld.sshfl [vmem:[#allocation1 + $0x38] sm:$0xff pattern:$0x73625140]
    %68 = vst [vmem:[#allocation1] ss:$4 sm:$0xff] %v47
    %69 = vst [vmem:[%s58] ss:$4 sm:$0xff] %v48
    %v70 = vld.sshfl [vmem:[#allocation1] sm:$0xff pattern:$0x73625140]
    %v71 = vld.sshfl [vmem:[#allocation1 + $0x8] sm:$0xff pattern:$0x73625140]
    %v72 = vld.sshfl [vmem:[#allocation1 + $0x10] sm:$0xff pattern:$0x73625140]
    %v73 = vld.sshfl [vmem:[#allocation1 + $0x18] sm:$0xff pattern:$0x73625140]
    %v74 = vld.sshfl [vmem:[#allocation1 + $0x20] sm:$0xff pattern:$0x73625140]
    %v75 = vld.sshfl [vmem:[#allocation1 + $0x28] sm:$0xff pattern:$0x73625140]
    %v76 = vld.sshfl [vmem:[#allocation1 + $0x30] sm:$0xff pattern:$0x73625140]
    %v77 = vld.sshfl [vmem:[#allocation1 + $0x38] sm:$0xff pattern:$0x73625140]
    %78 = vst [vmem:[#allocation1] ss:$4 sm:$0xff] %v49
    %79 = vst [vmem:[%s58] ss:$4 sm:$0xff] %v50
    %v80 = vld.sshfl [vmem:[#allocation1] sm:$0xff pattern:$0x73625140]
    %v81 = vld.sshfl [vmem:[#allocation1 + $0x8] sm:$0xff pattern:$0x73625140]
    %v82 = vld.sshfl [vmem:[#allocation1 + $0x10] sm:$0xff pattern:$0x73625140]
    %v83 = vld.sshfl [vmem:[#allocation1 + $0x18] sm:$0xff pattern:$0x73625140]
    %v84 = vld.sshfl [vmem:[#allocation1 + $0x20] sm:$0xff pattern:$0x73625140]
    %v85 = vld.sshfl [vmem:[#allocation1 + $0x28] sm:$0xff pattern:$0x73625140]
    %v86 = vld.sshfl [vmem:[#allocation1 + $0x30] sm:$0xff pattern:$0x73625140]
    %v87 = vld.sshfl [vmem:[#allocation1 + $0x38] sm:$0xff pattern:$0x73625140]
    %v112 = vpack.c.bf16 %v60, %v60
    %v113 = vpack.c.bf16 %v61, %v61
    %v114 = vpack.c.bf16 %v62, %v62
    %v115 = vpack.c.bf16 %v63, %v63
    %v116 = vpack.c.bf16 %v64, %v64
    %v117 = vpack.c.bf16 %v65, %v65
    %v118 = vpack.c.bf16 %v66, %v66
    %v119 = vpack.c.bf16 %v67, %v67
    %v120 = vpack.c.bf16 %v70, %v70
    %v121 = vpack.c.bf16 %v71, %v71
    %v122 = vpack.c.bf16 %v72, %v72
    %v123 = vpack.c.bf16 %v73, %v73
    %v124 = vpack.c.bf16 %v74, %v74
    %v125 = vpack.c.bf16 %v75, %v75
    %v126 = vpack.c.bf16 %v76, %v76
    %v127 = vpack.c.bf16 %v77, %v77
    %v128 = vpack.c.bf16 %v80, %v80
    %v129 = vpack.c.bf16 %v81, %v81
    %v130 = vpack.c.bf16 %v82, %v82
    %v131 = vpack.c.bf16 %v83, %v83
    %v132 = vpack.c.bf16 %v84, %v84
    %v133 = vpack.c.bf16 %v85, %v85
    %v134 = vpack.c.bf16 %v86, %v86
    %v135 = vpack.c.bf16 %v87, %v87
    %v136 = vld [vmem:[#allocation5] sm:$0xf]
    %v137 = vld [vmem:[#allocation5 + $0x4] sm:$0xf]
    %v138 = vld [vmem:[#allocation5 + $0x8] sm:$0xf]
    %v139 = vld [vmem:[#allocation5 + $0xc] sm:$0xf]
    %v140 = vld [vmem:[#allocation5 + $0x10] sm:$0xf]
    %v141 = vld [vmem:[#allocation5 + $0x14] sm:$0xf]
    %v142 = vld [vmem:[#allocation5 + $0x18] sm:$0xf]
    %v143 = vld [vmem:[#allocation5 + $0x1c] sm:$0xf]
    %v144 = vld [vmem:[#allocation5 + $0x20] sm:$0xf]
    %v145 = vld [vmem:[#allocation5 + $0x24] sm:$0xf]
    %v146 = vld [vmem:[#allocation5 + $0x28] sm:$0xf]
    %v147 = vld [vmem:[#allocation5 + $0x2c] sm:$0xf]
    %v148 = vld [vmem:[#allocation5 + $0x30] sm:$0xf]
    %v149 = vld [vmem:[#allocation5 + $0x34] sm:$0xf]
    %v150 = vld [vmem:[#allocation5 + $0x38] sm:$0xf]
    %v151 = vld [vmem:[#allocation5 + $0x3c] sm:$0xf]
    %v152 = vld [vmem:[#allocation5 + $0x40] sm:$0xf]
    %v153 = vld [vmem:[#allocation5 + $0x44] sm:$0xf]
    %v154 = vld [vmem:[#allocation5 + $0x48] sm:$0xf]
    %v155 = vld [vmem:[#allocation5 + $0x4c] sm:$0xf]
    %v156 = vld [vmem:[#allocation5 + $0x50] sm:$0xf]
    %v157 = vld [vmem:[#allocation5 + $0x54] sm:$0xf]
    %v158 = vld [vmem:[#allocation5 + $0x58] sm:$0xf]
    %v159 = vld [vmem:[#allocation5 + $0x5c] sm:$0xf]
    %v160 = vld [vmem:[#allocation5 + $0x60] sm:$0xf]
    %v161 = vld [vmem:[#allocation5 + $0x64] sm:$0xf]
    %v162 = vld [vmem:[#allocation5 + $0x68] sm:$0xf]
    %v163 = vld [vmem:[#allocation5 + $0x6c] sm:$0xf]
    %v164 = vld [vmem:[#allocation5 + $0x70] sm:$0xf]
    %v165 = vld [vmem:[#allocation5 + $0x74] sm:$0xf]
    %v166 = vld [vmem:[#allocation5 + $0x78] sm:$0xf]
    %v167 = vld [vmem:[#allocation5 + $0x7c] sm:$0xf]
    %v168 = vld [vmem:[#allocation5 + $0x80] sm:$0xf]
    %v169 = vld [vmem:[#allocation5 + $0x84] sm:$0xf]
    %v170 = vld [vmem:[#allocation5 + $0x88] sm:$0xf]
    %v171 = vld [vmem:[#allocation5 + $0x8c] sm:$0xf]
    %v172 = vld [vmem:[#allocation5 + $0x90] sm:$0xf]
    %v173 = vld [vmem:[#allocation5 + $0x94] sm:$0xf]
    %v174 = vld [vmem:[#allocation5 + $0x98] sm:$0xf]
    %v175 = vld [vmem:[#allocation5 + $0x9c] sm:$0xf]
    %v176 = vld [vmem:[#allocation5 + $0xa0] sm:$0xf]
    %v177 = vld [vmem:[#allocation5 + $0xa4] sm:$0xf]
    %v178 = vld [vmem:[#allocation5 + $0xa8] sm:$0xf]
    %v179 = vld [vmem:[#allocation5 + $0xac] sm:$0xf]
    %v180 = vld [vmem:[#allocation5 + $0xb0] sm:$0xf]
    %v181 = vld [vmem:[#allocation5 + $0xb4] sm:$0xf]
    %v182 = vld [vmem:[#allocation5 + $0xb8] sm:$0xf]
    %v183 = vld [vmem:[#allocation5 + $0xbc] sm:$0xf]
    %v184 = vld [vmem:[#allocation5 + $0xc0] sm:$0xf]
    %v185 = vld [vmem:[#allocation5 + $0xc4] sm:$0xf]
    %v186 = vld [vmem:[#allocation5 + $0xc8] sm:$0xf]
    %v187 = vld [vmem:[#allocation5 + $0xcc] sm:$0xf]
    %v188 = vld [vmem:[#allocation5 + $0xd0] sm:$0xf]
    %v189 = vld [vmem:[#allocation5 + $0xd4] sm:$0xf]
    %v190 = vld [vmem:[#allocation5 + $0xd8] sm:$0xf]
    %v191 = vld [vmem:[#allocation5 + $0xdc] sm:$0xf]
    %v192 = vld [vmem:[#allocation5 + $0xe0] sm:$0xf]
    %v193 = vld [vmem:[#allocation5 + $0xe4] sm:$0xf]
    %v194 = vld [vmem:[#allocation5 + $0xe8] sm:$0xf]
    %v195 = vld [vmem:[#allocation5 + $0xec] sm:$0xf]
    %v196 = vld [vmem:[#allocation5 + $0xf0] sm:$0xf]
    %v197 = vld [vmem:[#allocation5 + $0xf4] sm:$0xf]
    %v198 = vld [vmem:[#allocation5 + $0xf8] sm:$0xf]
    %v199 = vld [vmem:[#allocation5 + $0xfc] sm:$0xf]
    %v200 = vld [vmem:[#allocation5 + $0x100] sm:$0xf]
    %v201 = vld [vmem:[#allocation5 + $0x104] sm:$0xf]
    %v202 = vld [vmem:[#allocation5 + $0x108] sm:$0xf]
    %v203 = vld [vmem:[#allocation5 + $0x10c] sm:$0xf]
    %v204 = vld [vmem:[#allocation5 + $0x110] sm:$0xf]
    %v205 = vld [vmem:[#allocation5 + $0x114] sm:$0xf]
    %v206 = vld [vmem:[#allocation5 + $0x118] sm:$0xf]
    %v207 = vld [vmem:[#allocation5 + $0x11c] sm:$0xf]
    %v208 = vld [vmem:[#allocation5 + $0x120] sm:$0xf]
    %v209 = vld [vmem:[#allocation5 + $0x124] sm:$0xf]
    %v210 = vld [vmem:[#allocation5 + $0x128] sm:$0xf]
    %v211 = vld [vmem:[#allocation5 + $0x12c] sm:$0xf]
    %v212 = vld [vmem:[#allocation5 + $0x130] sm:$0xf]
    %v213 = vld [vmem:[#allocation5 + $0x134] sm:$0xf]
    %v214 = vld [vmem:[#allocation5 + $0x138] sm:$0xf]
    %v215 = vld [vmem:[#allocation5 + $0x13c] sm:$0xf]
    %v216 = vld [vmem:[#allocation5 + $0x140] sm:$0xf]
    %v217 = vld [vmem:[#allocation5 + $0x144] sm:$0xf]
    %v218 = vld [vmem:[#allocation5 + $0x148] sm:$0xf]
    %v219 = vld [vmem:[#allocation5 + $0x14c] sm:$0xf]
    %v220 = vld [vmem:[#allocation5 + $0x150] sm:$0xf]
    %v221 = vld [vmem:[#allocation5 + $0x154] sm:$0xf]
    %v222 = vld [vmem:[#allocation5 + $0x158] sm:$0xf]
    %v223 = vld [vmem:[#allocation5 + $0x15c] sm:$0xf]
    %v224 = vld [vmem:[#allocation5 + $0x160] sm:$0xf]
    %v225 = vld [vmem:[#allocation5 + $0x164] sm:$0xf]
    %v226 = vld [vmem:[#allocation5 + $0x168] sm:$0xf]
    %v227 = vld [vmem:[#allocation5 + $0x16c] sm:$0xf]
    %v228 = vld [vmem:[#allocation5 + $0x170] sm:$0xf]
    %v229 = vld [vmem:[#allocation5 + $0x174] sm:$0xf]
    %v230 = vld [vmem:[#allocation5 + $0x178] sm:$0xf]
    %v231 = vld [vmem:[#allocation5 + $0x17c] sm:$0xf]
    %v232 = vld [vmem:[#allocation5 + $0x180] sm:$0xf]
    %v233 = vld [vmem:[#allocation5 + $0x184] sm:$0xf]
    %v234 = vld [vmem:[#allocation5 + $0x188] sm:$0xf]
    %v235 = vld [vmem:[#allocation5 + $0x18c] sm:$0xf]
    %v236 = vld [vmem:[#allocation5 + $0x190] sm:$0xf]
    %v237 = vld [vmem:[#allocation5 + $0x194] sm:$0xf]
    %v238 = vld [vmem:[#allocation5 + $0x198] sm:$0xf]
    %v239 = vld [vmem:[#allocation5 + $0x19c] sm:$0xf]
    %v240 = vld [vmem:[#allocation5 + $0x1a0] sm:$0xf]
    %v241 = vld [vmem:[#allocation5 + $0x1a4] sm:$0xf]
    %v242 = vld [vmem:[#allocation5 + $0x1a8] sm:$0xf]
    %v243 = vld [vmem:[#allocation5 + $0x1ac] sm:$0xf]
    %v244 = vld [vmem:[#allocation5 + $0x1b0] sm:$0xf]
    %v245 = vld [vmem:[#allocation5 + $0x1b4] sm:$0xf]
    %v246 = vld [vmem:[#allocation5 + $0x1b8] sm:$0xf]
    %v247 = vld [vmem:[#allocation5 + $0x1bc] sm:$0xf]
    %v248 = vld [vmem:[#allocation5 + $0x1c0] sm:$0xf]
    %v249 = vld [vmem:[#allocation5 + $0x1c4] sm:$0xf]
    %v250 = vld [vmem:[#allocation5 + $0x1c8] sm:$0xf]
    %v251 = vld [vmem:[#allocation5 + $0x1cc] sm:$0xf]
    %v252 = vld [vmem:[#allocation5 + $0x1d0] sm:$0xf]
    %v253 = vld [vmem:[#allocation5 + $0x1d4] sm:$0xf]
    %v254 = vld [vmem:[#allocation5 + $0x1d8] sm:$0xf]
    %v255 = vld [vmem:[#allocation5 + $0x1dc] sm:$0xf]
    %v256 = vld [vmem:[#allocation5 + $0x1e0] sm:$0xf]
    %v257 = vld [vmem:[#allocation5 + $0x1e4] sm:$0xf]
    %v258 = vld [vmem:[#allocation5 + $0x1e8] sm:$0xf]
    %v259 = vld [vmem:[#allocation5 + $0x1ec] sm:$0xf]
    %v260 = vld [vmem:[#allocation5 + $0x1f0] sm:$0xf]
    %v261 = vld [vmem:[#allocation5 + $0x1f4] sm:$0xf]
    %v262 = vld [vmem:[#allocation5 + $0x1f8] sm:$0xf]
    %v263 = vld [vmem:[#allocation5 + $0x1fc] sm:$0xf]
    %v264 = vld [vmem:[#allocation5 + $0x200] sm:$0xf]
    %v265 = vld [vmem:[#allocation5 + $0x204] sm:$0xf]
    %v266 = vld [vmem:[#allocation5 + $0x208] sm:$0xf]
    %v267 = vld [vmem:[#allocation5 + $0x20c] sm:$0xf]
    %v268 = vld [vmem:[#allocation5 + $0x210] sm:$0xf]
    %v269 = vld [vmem:[#allocation5 + $0x214] sm:$0xf]
    %v270 = vld [vmem:[#allocation5 + $0x218] sm:$0xf]
    %v271 = vld [vmem:[#allocation5 + $0x21c] sm:$0xf]
    %v272 = vld [vmem:[#allocation5 + $0x220] sm:$0xf]
    %v273 = vld [vmem:[#allocation5 + $0x224] sm:$0xf]
    %v274 = vld [vmem:[#allocation5 + $0x228] sm:$0xf]
    %v275 = vld [vmem:[#allocation5 + $0x22c] sm:$0xf]
    %v276 = vld [vmem:[#allocation5 + $0x230] sm:$0xf]
    %v277 = vld [vmem:[#allocation5 + $0x234] sm:$0xf]
    %v278 = vld [vmem:[#allocation5 + $0x238] sm:$0xf]
    %v279 = vld [vmem:[#allocation5 + $0x23c] sm:$0xf]
    %v280 = vld [vmem:[#allocation5 + $0x240] sm:$0xf]
    %v281 = vld [vmem:[#allocation5 + $0x244] sm:$0xf]
    %v282 = vld [vmem:[#allocation5 + $0x248] sm:$0xf]
    %v283 = vld [vmem:[#allocation5 + $0x24c] sm:$0xf]
    %v284 = vld [vmem:[#allocation5 + $0x250] sm:$0xf]
    %v285 = vld [vmem:[#allocation5 + $0x254] sm:$0xf]
    %v286 = vld [vmem:[#allocation5 + $0x258] sm:$0xf]
    %v287 = vld [vmem:[#allocation5 + $0x25c] sm:$0xf]
    %v288 = vld [vmem:[#allocation5 + $0x260] sm:$0xf]
    %v289 = vld [vmem:[#allocation5 + $0x264] sm:$0xf]
    %v290 = vld [vmem:[#allocation5 + $0x268] sm:$0xf]
    %v291 = vld [vmem:[#allocation5 + $0x26c] sm:$0xf]
    %v292 = vld [vmem:[#allocation5 + $0x270] sm:$0xf]
    %v293 = vld [vmem:[#allocation5 + $0x274] sm:$0xf]
    %v294 = vld [vmem:[#allocation5 + $0x278] sm:$0xf]
    %v295 = vld [vmem:[#allocation5 + $0x27c] sm:$0xf]
    %v296 = vld [vmem:[#allocation5 + $0x280] sm:$0xf]
    %v297 = vld [vmem:[#allocation5 + $0x284] sm:$0xf]
    %v298 = vld [vmem:[#allocation5 + $0x288] sm:$0xf]
    %v299 = vld [vmem:[#allocation5 + $0x28c] sm:$0xf]
    %v300 = vld [vmem:[#allocation5 + $0x290] sm:$0xf]
    %v301 = vld [vmem:[#allocation5 + $0x294] sm:$0xf]
    %v302 = vld [vmem:[#allocation5 + $0x298] sm:$0xf]
    %v303 = vld [vmem:[#allocation5 + $0x29c] sm:$0xf]
    %v304 = vld [vmem:[#allocation5 + $0x2a0] sm:$0xf]
    %v305 = vld [vmem:[#allocation5 + $0x2a4] sm:$0xf]
    %v306 = vld [vmem:[#allocation5 + $0x2a8] sm:$0xf]
    %v307 = vld [vmem:[#allocation5 + $0x2ac] sm:$0xf]
    %v308 = vld [vmem:[#allocation5 + $0x2b0] sm:$0xf]
    %v309 = vld [vmem:[#allocation5 + $0x2b4] sm:$0xf]
    %v310 = vld [vmem:[#allocation5 + $0x2b8] sm:$0xf]
    %v311 = vld [vmem:[#allocation5 + $0x2bc] sm:$0xf]
    %v312 = vld [vmem:[#allocation5 + $0x2c0] sm:$0xf]
    %v313 = vld [vmem:[#allocation5 + $0x2c4] sm:$0xf]
    %v314 = vld [vmem:[#allocation5 + $0x2c8] sm:$0xf]
    %v315 = vld [vmem:[#allocation5 + $0x2cc] sm:$0xf]
    %v316 = vld [vmem:[#allocation5 + $0x2d0] sm:$0xf]
    %v317 = vld [vmem:[#allocation5 + $0x2d4] sm:$0xf]
    %v318 = vld [vmem:[#allocation5 + $0x2d8] sm:$0xf]
    %v319 = vld [vmem:[#allocation5 + $0x2dc] sm:$0xf]
    %v320 = vld [vmem:[#allocation5 + $0x2e0] sm:$0xf]
    %v321 = vld [vmem:[#allocation5 + $0x2e4] sm:$0xf]
    %v322 = vld [vmem:[#allocation5 + $0x2e8] sm:$0xf]
    %v323 = vld [vmem:[#allocation5 + $0x2ec] sm:$0xf]
    %v324 = vld [vmem:[#allocation5 + $0x2f0] sm:$0xf]
    %v325 = vld [vmem:[#allocation5 + $0x2f4] sm:$0xf]
    %v326 = vld [vmem:[#allocation5 + $0x2f8] sm:$0xf]
    %v327 = vld [vmem:[#allocation5 + $0x2fc] sm:$0xf]
    %v328 = vld [vmem:[#allocation5 + $0x300] sm:$0xf]
    %v329 = vld [vmem:[#allocation5 + $0x304] sm:$0xf]
    %v330 = vld [vmem:[#allocation5 + $0x308] sm:$0xf]
    %v331 = vld [vmem:[#allocation5 + $0x30c] sm:$0xf]
    %v332 = vld [vmem:[#allocation5 + $0x310] sm:$0xf]
    %v333 = vld [vmem:[#allocation5 + $0x314] sm:$0xf]
    %v334 = vld [vmem:[#allocation5 + $0x318] sm:$0xf]
    %v335 = vld [vmem:[#allocation5 + $0x31c] sm:$0xf]
    %v336 = vld [vmem:[#allocation5 + $0x320] sm:$0xf]
    %v337 = vld [vmem:[#allocation5 + $0x324] sm:$0xf]
    %v338 = vld [vmem:[#allocation5 + $0x328] sm:$0xf]
    %v339 = vld [vmem:[#allocation5 + $0x32c] sm:$0xf]
    %v340 = vld [vmem:[#allocation5 + $0x330] sm:$0xf]
    %v341 = vld [vmem:[#allocation5 + $0x334] sm:$0xf]
    %v342 = vld [vmem:[#allocation5 + $0x338] sm:$0xf]
    %v343 = vld [vmem:[#allocation5 + $0x33c] sm:$0xf]
    %v344 = vld [vmem:[#allocation5 + $0x340] sm:$0xf]
    %v345 = vld [vmem:[#allocation5 + $0x344] sm:$0xf]
    %v346 = vld [vmem:[#allocation5 + $0x348] sm:$0xf]
    %v347 = vld [vmem:[#allocation5 + $0x34c] sm:$0xf]
    %v348 = vld [vmem:[#allocation5 + $0x350] sm:$0xf]
    %v349 = vld [vmem:[#allocation5 + $0x354] sm:$0xf]
    %v350 = vld [vmem:[#allocation5 + $0x358] sm:$0xf]
    %v351 = vld [vmem:[#allocation5 + $0x35c] sm:$0xf]
    %v352 = vld [vmem:[#allocation5 + $0x360] sm:$0xf]
    %v353 = vld [vmem:[#allocation5 + $0x364] sm:$0xf]
    %v354 = vld [vmem:[#allocation5 + $0x368] sm:$0xf]
    %v355 = vld [vmem:[#allocation5 + $0x36c] sm:$0xf]
    %v356 = vld [vmem:[#allocation5 + $0x370] sm:$0xf]
    %v357 = vld [vmem:[#allocation5 + $0x374] sm:$0xf]
    %v358 = vld [vmem:[#allocation5 + $0x378] sm:$0xf]
    %v359 = vld [vmem:[#allocation5 + $0x37c] sm:$0xf]
    %v360 = vld [vmem:[#allocation5 + $0x380] sm:$0xf]
    %v361 = vld [vmem:[#allocation5 + $0x384] sm:$0xf]
    %v362 = vld [vmem:[#allocation5 + $0x388] sm:$0xf]
    %v363 = vld [vmem:[#allocation5 + $0x38c] sm:$0xf]
    %v364 = vld [vmem:[#allocation5 + $0x390] sm:$0xf]
    %v365 = vld [vmem:[#allocation5 + $0x394] sm:$0xf]
    %v366 = vld [vmem:[#allocation5 + $0x398] sm:$0xf]
    %v367 = vld [vmem:[#allocation5 + $0x39c] sm:$0xf]
    %v368 = vld [vmem:[#allocation5 + $0x3a0] sm:$0xf]
    %v369 = vld [vmem:[#allocation5 + $0x3a4] sm:$0xf]
    %v370 = vld [vmem:[#allocation5 + $0x3a8] sm:$0xf]
    %v371 = vld [vmem:[#allocation5 + $0x3ac] sm:$0xf]
    %v372 = vld [vmem:[#allocation5 + $0x3b0] sm:$0xf]
    %v373 = vld [vmem:[#allocation5 + $0x3b4] sm:$0xf]
    %v374 = vld [vmem:[#allocation5 + $0x3b8] sm:$0xf]
    %v375 = vld [vmem:[#allocation5 + $0x3bc] sm:$0xf]
    %v376 = vld [vmem:[#allocation5 + $0x3c0] sm:$0xf]
    %v377 = vld [vmem:[#allocation5 + $0x3c4] sm:$0xf]
    %v378 = vld [vmem:[#allocation5 + $0x3c8] sm:$0xf]
    %v379 = vld [vmem:[#allocation5 + $0x3cc] sm:$0xf]
    %v380 = vld [vmem:[#allocation5 + $0x3d0] sm:$0xf]
    %v381 = vld [vmem:[#allocation5 + $0x3d4] sm:$0xf]
    %v382 = vld [vmem:[#allocation5 + $0x3d8] sm:$0xf]
    %v383 = vld [vmem:[#allocation5 + $0x3dc] sm:$0xf]
    %v384 = vld [vmem:[#allocation5 + $0x3e0] sm:$0xf]
    %v385 = vld [vmem:[#allocation5 + $0x3e4] sm:$0xf]
    %v386 = vld [vmem:[#allocation5 + $0x3e8] sm:$0xf]
    %v387 = vld [vmem:[#allocation5 + $0x3ec] sm:$0xf]
    %v388 = vld [vmem:[#allocation5 + $0x3f0] sm:$0xf]
    %v389 = vld [vmem:[#allocation5 + $0x3f4] sm:$0xf]
    %v390 = vld [vmem:[#allocation5 + $0x3f8] sm:$0xf]
    %v391 = vld [vmem:[#allocation5 + $0x3fc] sm:$0xf]
    %v392 = vld [vmem:[#allocation5 + $0x400] sm:$0xf]
    %v393 = vld [vmem:[#allocation5 + $0x404] sm:$0xf]
    %v394 = vld [vmem:[#allocation5 + $0x408] sm:$0xf]
    %v395 = vld [vmem:[#allocation5 + $0x40c] sm:$0xf]
    %v396 = vld [vmem:[#allocation5 + $0x410] sm:$0xf]
    %v397 = vld [vmem:[#allocation5 + $0x414] sm:$0xf]
    %v398 = vld [vmem:[#allocation5 + $0x418] sm:$0xf]
    %v399 = vld [vmem:[#allocation5 + $0x41c] sm:$0xf]
    %v400 = vld [vmem:[#allocation5 + $0x420] sm:$0xf]
    %v401 = vld [vmem:[#allocation5 + $0x424] sm:$0xf]
    %v402 = vld [vmem:[#allocation5 + $0x428] sm:$0xf]
    %v403 = vld [vmem:[#allocation5 + $0x42c] sm:$0xf]
    %v404 = vld [vmem:[#allocation5 + $0x430] sm:$0xf]
    %v405 = vld [vmem:[#allocation5 + $0x434] sm:$0xf]
    %v406 = vld [vmem:[#allocation5 + $0x438] sm:$0xf]
    %v407 = vld [vmem:[#allocation5 + $0x43c] sm:$0xf]
    %v408 = vld [vmem:[#allocation5 + $0x440] sm:$0xf]
    %v409 = vld [vmem:[#allocation5 + $0x444] sm:$0xf]
    %v410 = vld [vmem:[#allocation5 + $0x448] sm:$0xf]
    %v411 = vld [vmem:[#allocation5 + $0x44c] sm:$0xf]
    %v412 = vld [vmem:[#allocation5 + $0x450] sm:$0xf]
    %v413 = vld [vmem:[#allocation5 + $0x454] sm:$0xf]
    %v414 = vld [vmem:[#allocation5 + $0x458] sm:$0xf]
    %v415 = vld [vmem:[#allocation5 + $0x45c] sm:$0xf]
    %v416 = vld [vmem:[#allocation5 + $0x460] sm:$0xf]
    %v417 = vld [vmem:[#allocation5 + $0x464] sm:$0xf]
    %v418 = vld [vmem:[#allocation5 + $0x468] sm:$0xf]
    %v419 = vld [vmem:[#allocation5 + $0x46c] sm:$0xf]
    %v420 = vld [vmem:[#allocation5 + $0x470] sm:$0xf]
    %v421 = vld [vmem:[#allocation5 + $0x474] sm:$0xf]
    %v422 = vld [vmem:[#allocation5 + $0x478] sm:$0xf]
    %v423 = vld [vmem:[#allocation5 + $0x47c] sm:$0xf]
    %v424 = vld [vmem:[#allocation5 + $0x480] sm:$0xf]
    %v425 = vld [vmem:[#allocation5 + $0x484] sm:$0xf]
    %v426 = vld [vmem:[#allocation5 + $0x488] sm:$0xf]
    %v427 = vld [vmem:[#allocation5 + $0x48c] sm:$0xf]
    %v428 = vld [vmem:[#allocation5 + $0x490] sm:$0xf]
    %v429 = vld [vmem:[#allocation5 + $0x494] sm:$0xf]
    %v430 = vld [vmem:[#allocation5 + $0x498] sm:$0xf]
    %v431 = vld [vmem:[#allocation5 + $0x49c] sm:$0xf]
    %v432 = vld [vmem:[#allocation5 + $0x4a0] sm:$0xf]
    %v433 = vld [vmem:[#allocation5 + $0x4a4] sm:$0xf]
    %v434 = vld [vmem:[#allocation5 + $0x4a8] sm:$0xf]
    %v435 = vld [vmem:[#allocation5 + $0x4ac] sm:$0xf]
    %v436 = vld [vmem:[#allocation5 + $0x4b0] sm:$0xf]
    %v437 = vld [vmem:[#allocation5 + $0x4b4] sm:$0xf]
    %v438 = vld [vmem:[#allocation5 + $0x4b8] sm:$0xf]
    %v439 = vld [vmem:[#allocation5 + $0x4bc] sm:$0xf]
    %v440 = vld [vmem:[#allocation5 + $0x4c0] sm:$0xf]
    %v441 = vld [vmem:[#allocation5 + $0x4c4] sm:$0xf]
    %v442 = vld [vmem:[#allocation5 + $0x4c8] sm:$0xf]
    %v443 = vld [vmem:[#allocation5 + $0x4cc] sm:$0xf]
    %v444 = vld [vmem:[#allocation5 + $0x4d0] sm:$0xf]
    %v445 = vld [vmem:[#allocation5 + $0x4d4] sm:$0xf]
    %v446 = vld [vmem:[#allocation5 + $0x4d8] sm:$0xf]
    %v447 = vld [vmem:[#allocation5 + $0x4dc] sm:$0xf]
    %v448 = vld [vmem:[#allocation5 + $0x4e0] sm:$0xf]
    %v449 = vld [vmem:[#allocation5 + $0x4e4] sm:$0xf]
    %v450 = vld [vmem:[#allocation5 + $0x4e8] sm:$0xf]
    %v451 = vld [vmem:[#allocation5 + $0x4ec] sm:$0xf]
    %v452 = vld [vmem:[#allocation5 + $0x4f0] sm:$0xf]
    %v453 = vld [vmem:[#allocation5 + $0x4f4] sm:$0xf]
    %v454 = vld [vmem:[#allocation5 + $0x4f8] sm:$0xf]
    %v455 = vld [vmem:[#allocation5 + $0x4fc] sm:$0xf]
    %v456 = vld [vmem:[#allocation5 + $0x500] sm:$0xf]
    %v457 = vld [vmem:[#allocation5 + $0x504] sm:$0xf]
    %v458 = vld [vmem:[#allocation5 + $0x508] sm:$0xf]
    %v459 = vld [vmem:[#allocation5 + $0x50c] sm:$0xf]
    %v460 = vld [vmem:[#allocation5 + $0x510] sm:$0xf]
    %v461 = vld [vmem:[#allocation5 + $0x514] sm:$0xf]
    %v462 = vld [vmem:[#allocation5 + $0x518] sm:$0xf]
    %v463 = vld [vmem:[#allocation5 + $0x51c] sm:$0xf]
    %v464 = vld [vmem:[#allocation5 + $0x520] sm:$0xf]
    %v465 = vld [vmem:[#allocation5 + $0x524] sm:$0xf]
    %v466 = vld [vmem:[#allocation5 + $0x528] sm:$0xf]
    %v467 = vld [vmem:[#allocation5 + $0x52c] sm:$0xf]
    %v468 = vld [vmem:[#allocation5 + $0x530] sm:$0xf]
    %v469 = vld [vmem:[#allocation5 + $0x534] sm:$0xf]
    %v470 = vld [vmem:[#allocation5 + $0x538] sm:$0xf]
    %v471 = vld [vmem:[#allocation5 + $0x53c] sm:$0xf]
    %v472 = vld [vmem:[#allocation5 + $0x540] sm:$0xf]
    %v473 = vld [vmem:[#allocation5 + $0x544] sm:$0xf]
    %v474 = vld [vmem:[#allocation5 + $0x548] sm:$0xf]
    %v475 = vld [vmem:[#allocation5 + $0x54c] sm:$0xf]
    %v476 = vld [vmem:[#allocation5 + $0x550] sm:$0xf]
    %v477 = vld [vmem:[#allocation5 + $0x554] sm:$0xf]
    %v478 = vld [vmem:[#allocation5 + $0x558] sm:$0xf]
    %v479 = vld [vmem:[#allocation5 + $0x55c] sm:$0xf]
    %v480 = vld [vmem:[#allocation5 + $0x560] sm:$0xf]
    %v481 = vld [vmem:[#allocation5 + $0x564] sm:$0xf]
    %v482 = vld [vmem:[#allocation5 + $0x568] sm:$0xf]
    %v483 = vld [vmem:[#allocation5 + $0x56c] sm:$0xf]
    %v484 = vld [vmem:[#allocation5 + $0x570] sm:$0xf]
    %v485 = vld [vmem:[#allocation5 + $0x574] sm:$0xf]
    %v486 = vld [vmem:[#allocation5 + $0x578] sm:$0xf]
    %v487 = vld [vmem:[#allocation5 + $0x57c] sm:$0xf]
    %v488 = vld [vmem:[#allocation5 + $0x580] sm:$0xf]
    %v489 = vld [vmem:[#allocation5 + $0x584] sm:$0xf]
    %v490 = vld [vmem:[#allocation5 + $0x588] sm:$0xf]
    %v491 = vld [vmem:[#allocation5 + $0x58c] sm:$0xf]
    %v492 = vld [vmem:[#allocation5 + $0x590] sm:$0xf]
    %v493 = vld [vmem:[#allocation5 + $0x594] sm:$0xf]
    %v494 = vld [vmem:[#allocation5 + $0x598] sm:$0xf]
    %v495 = vld [vmem:[#allocation5 + $0x59c] sm:$0xf]
    %v496 = vld [vmem:[#allocation5 + $0x5a0] sm:$0xf]
    %v497 = vld [vmem:[#allocation5 + $0x5a4] sm:$0xf]
    %v498 = vld [vmem:[#allocation5 + $0x5a8] sm:$0xf]
    %v499 = vld [vmem:[#allocation5 + $0x5ac] sm:$0xf]
    %v500 = vld [vmem:[#allocation5 + $0x5b0] sm:$0xf]
    %v501 = vld [vmem:[#allocation5 + $0x5b4] sm:$0xf]
    %v502 = vld [vmem:[#allocation5 + $0x5b8] sm:$0xf]
    %v503 = vld [vmem:[#allocation5 + $0x5bc] sm:$0xf]
    %v504 = vld [vmem:[#allocation5 + $0x5c0] sm:$0xf]
    %v505 = vld [vmem:[#allocation5 + $0x5c4] sm:$0xf]
    %v506 = vld [vmem:[#allocation5 + $0x5c8] sm:$0xf]
    %v507 = vld [vmem:[#allocation5 + $0x5cc] sm:$0xf]
    %v508 = vld [vmem:[#allocation5 + $0x5d0] sm:$0xf]
    %v509 = vld [vmem:[#allocation5 + $0x5d4] sm:$0xf]
    %v510 = vld [vmem:[#allocation5 + $0x5d8] sm:$0xf]
    %v511 = vld [vmem:[#allocation5 + $0x5dc] sm:$0xf]
    %v512 = vld [vmem:[#allocation5 + $0x5e0] sm:$0xf]
    %v513 = vld [vmem:[#allocation5 + $0x5e4] sm:$0xf]
    %v514 = vld [vmem:[#allocation5 + $0x5e8] sm:$0xf]
    %v515 = vld [vmem:[#allocation5 + $0x5ec] sm:$0xf]
    %v516 = vld [vmem:[#allocation5 + $0x5f0] sm:$0xf]
    %v517 = vld [vmem:[#allocation5 + $0x5f4] sm:$0xf]
    %v518 = vld [vmem:[#allocation5 + $0x5f8] sm:$0xf]
    %v519 = vld [vmem:[#allocation5 + $0x5fc] sm:$0xf]
    %v520 = vld [vmem:[%s2] sm:$0x1]
    %v522 = vperm.slane %v520, 0
    %v908 = vunpack.c.l.b16 %v136
    %v909 = vunpack.c.l.b16 %v137
    %v910 = vunpack.c.l.b16 %v138
    %v911 = vunpack.c.l.b16 %v139
    %v912 = vunpack.c.l.b16 %v140
    %v913 = vunpack.c.l.b16 %v141
    %v914 = vunpack.c.l.b16 %v142
    %v915 = vunpack.c.l.b16 %v143
    %v916 = vunpack.c.l.b16 %v144
    %v917 = vunpack.c.l.b16 %v145
    %v918 = vunpack.c.l.b16 %v146
    %v919 = vunpack.c.l.b16 %v147
    %v920 = vunpack.c.l.b16 %v148
    %v921 = vunpack.c.l.b16 %v149
    %v922 = vunpack.c.l.b16 %v150
    %v923 = vunpack.c.l.b16 %v151
    %v924 = vunpack.c.l.b16 %v152
    %v925 = vunpack.c.l.b16 %v153
    %v926 = vunpack.c.l.b16 %v154
    %v927 = vunpack.c.l.b16 %v155
    %v928 = vunpack.c.l.b16 %v156
    %v929 = vunpack.c.l.b16 %v157
    %v930 = vunpack.c.l.b16 %v158
    %v931 = vunpack.c.l.b16 %v159
    %v932 = vunpack.c.l.b16 %v160
    %v933 = vunpack.c.l.b16 %v161
    %v934 = vunpack.c.l.b16 %v162
    %v935 = vunpack.c.l.b16 %v163
    %v936 = vunpack.c.l.b16 %v164
    %v937 = vunpack.c.l.b16 %v165
    %v938 = vunpack.c.l.b16 %v166
    %v939 = vunpack.c.l.b16 %v167
    %v940 = vunpack.c.l.b16 %v168
    %v941 = vunpack.c.l.b16 %v169
    %v942 = vunpack.c.l.b16 %v170
    %v943 = vunpack.c.l.b16 %v171
    %v944 = vunpack.c.l.b16 %v172
    %v945 = vunpack.c.l.b16 %v173
    %v946 = vunpack.c.l.b16 %v174
    %v947 = vunpack.c.l.b16 %v175
    %v948 = vunpack.c.l.b16 %v176
    %v949 = vunpack.c.l.b16 %v177
    %v950 = vunpack.c.l.b16 %v178
    %v951 = vunpack.c.l.b16 %v179
    %v952 = vunpack.c.l.b16 %v180
    %v953 = vunpack.c.l.b16 %v181
    %v954 = vunpack.c.l.b16 %v182
    %v955 = vunpack.c.l.b16 %v183
    %v956 = vunpack.c.l.b16 %v184
    %v957 = vunpack.c.l.b16 %v185
    %v958 = vunpack.c.l.b16 %v186
    %v959 = vunpack.c.l.b16 %v187
    %v960 = vunpack.c.l.b16 %v188
    %v961 = vunpack.c.l.b16 %v189
    %v962 = vunpack.c.l.b16 %v190
    %v963 = vunpack.c.l.b16 %v191
    %v964 = vunpack.c.l.b16 %v192
    %v965 = vunpack.c.l.b16 %v193
    %v966 = vunpack.c.l.b16 %v194
    %v967 = vunpack.c.l.b16 %v195
    %v968 = vunpack.c.l.b16 %v196
    %v969 = vunpack.c.l.b16 %v197
    %v970 = vunpack.c.l.b16 %v198
    %v971 = vunpack.c.l.b16 %v199
    %v972 = vunpack.c.l.b16 %v200
    %v973 = vunpack.c.l.b16 %v201
    %v974 = vunpack.c.l.b16 %v202
    %v975 = vunpack.c.l.b16 %v203
    %v976 = vunpack.c.l.b16 %v204
    %v977 = vunpack.c.l.b16 %v205
    %v978 = vunpack.c.l.b16 %v206
    %v979 = vunpack.c.l.b16 %v207
    %v980 = vunpack.c.l.b16 %v208
    %v981 = vunpack.c.l.b16 %v209
    %v982 = vunpack.c.l.b16 %v210
    %v983 = vunpack.c.l.b16 %v211
    %v984 = vunpack.c.l.b16 %v212
    %v985 = vunpack.c.l.b16 %v213
    %v986 = vunpack.c.l.b16 %v214
    %v987 = vunpack.c.l.b16 %v215
    %v988 = vunpack.c.l.b16 %v216
    %v989 = vunpack.c.l.b16 %v217
    %v990 = vunpack.c.l.b16 %v218
    %v991 = vunpack.c.l.b16 %v219
    %v992 = vunpack.c.l.b16 %v220
    %v993 = vunpack.c.l.b16 %v221
    %v994 = vunpack.c.l.b16 %v222
    %v995 = vunpack.c.l.b16 %v223
    %v996 = vunpack.c.l.b16 %v224
    %v997 = vunpack.c.l.b16 %v225
    %v998 = vunpack.c.l.b16 %v226
    %v999 = vunpack.c.l.b16 %v227
    %v1000 = vunpack.c.l.b16 %v228
    %v1001 = vunpack.c.l.b16 %v229
    %v1002 = vunpack.c.l.b16 %v230
    %v1003 = vunpack.c.l.b16 %v231
    %v1004 = vunpack.c.l.b16 %v232
    %v1005 = vunpack.c.l.b16 %v233
    %v1006 = vunpack.c.l.b16 %v234
    %v1007 = vunpack.c.l.b16 %v235
    %v1008 = vunpack.c.l.b16 %v236
    %v1009 = vunpack.c.l.b16 %v237
    %v1010 = vunpack.c.l.b16 %v238
    %v1011 = vunpack.c.l.b16 %v239
    %v1012 = vunpack.c.l.b16 %v240
    %v1013 = vunpack.c.l.b16 %v241
    %v1014 = vunpack.c.l.b16 %v242
    %v1015 = vunpack.c.l.b16 %v243
    %v1016 = vunpack.c.l.b16 %v244
    %v1017 = vunpack.c.l.b16 %v245
    %v1018 = vunpack.c.l.b16 %v246
    %v1019 = vunpack.c.l.b16 %v247
    %v1020 = vunpack.c.l.b16 %v248
    %v1021 = vunpack.c.l.b16 %v249
    %v1022 = vunpack.c.l.b16 %v250
    %v1023 = vunpack.c.l.b16 %v251
    %v1024 = vunpack.c.l.b16 %v252
    %v1025 = vunpack.c.l.b16 %v253
    %v1026 = vunpack.c.l.b16 %v254
    %v1027 = vunpack.c.l.b16 %v255
    %v1028 = vunpack.c.l.b16 %v256
    %v1029 = vunpack.c.l.b16 %v257
    %v1030 = vunpack.c.l.b16 %v258
    %v1031 = vunpack.c.l.b16 %v259
    %v1032 = vunpack.c.l.b16 %v260
    %v1033 = vunpack.c.l.b16 %v261
    %v1034 = vunpack.c.l.b16 %v262
    %v1035 = vunpack.c.l.b16 %v263
    %v1036 = vunpack.c.l.b16 %v264
    %v1037 = vunpack.c.l.b16 %v265
    %v1038 = vunpack.c.l.b16 %v266
    %v1039 = vunpack.c.l.b16 %v267
    %v1040 = vunpack.c.l.b16 %v268
    %v1041 = vunpack.c.l.b16 %v269
    %v1042 = vunpack.c.l.b16 %v270
    %v1043 = vunpack.c.l.b16 %v271
    %v1044 = vunpack.c.l.b16 %v272
    %v1045 = vunpack.c.l.b16 %v273
    %v1046 = vunpack.c.l.b16 %v274
    %v1047 = vunpack.c.l.b16 %v275
    %v1048 = vunpack.c.l.b16 %v276
    %v1049 = vunpack.c.l.b16 %v277
    %v1050 = vunpack.c.l.b16 %v278
    %v1051 = vunpack.c.l.b16 %v279
    %v1052 = vunpack.c.l.b16 %v280
    %v1053 = vunpack.c.l.b16 %v281
    %v1054 = vunpack.c.l.b16 %v282
    %v1055 = vunpack.c.l.b16 %v283
    %v1056 = vunpack.c.l.b16 %v284
    %v1057 = vunpack.c.l.b16 %v285
    %v1058 = vunpack.c.l.b16 %v286
    %v1059 = vunpack.c.l.b16 %v287
    %v1060 = vunpack.c.l.b16 %v288
    %v1061 = vunpack.c.l.b16 %v289
    %v1062 = vunpack.c.l.b16 %v290
    %v1063 = vunpack.c.l.b16 %v291
    %v1064 = vunpack.c.l.b16 %v292
    %v1065 = vunpack.c.l.b16 %v293
    %v1066 = vunpack.c.l.b16 %v294
    %v1067 = vunpack.c.l.b16 %v295
    %v1068 = vunpack.c.l.b16 %v296
    %v1069 = vunpack.c.l.b16 %v297
    %v1070 = vunpack.c.l.b16 %v298
    %v1071 = vunpack.c.l.b16 %v299
    %v1072 = vunpack.c.l.b16 %v300
    %v1073 = vunpack.c.l.b16 %v301
    %v1074 = vunpack.c.l.b16 %v302
    %v1075 = vunpack.c.l.b16 %v303
    %v1076 = vunpack.c.l.b16 %v304
    %v1077 = vunpack.c.l.b16 %v305
    %v1078 = vunpack.c.l.b16 %v306
    %v1079 = vunpack.c.l.b16 %v307
    %v1080 = vunpack.c.l.b16 %v308
    %v1081 = vunpack.c.l.b16 %v309
    %v1082 = vunpack.c.l.b16 %v310
    %v1083 = vunpack.c.l.b16 %v311
    %v1084 = vunpack.c.l.b16 %v312
    %v1085 = vunpack.c.l.b16 %v313
    %v1086 = vunpack.c.l.b16 %v314
    %v1087 = vunpack.c.l.b16 %v315
    %v1088 = vunpack.c.l.b16 %v316
    %v1089 = vunpack.c.l.b16 %v317
    %v1090 = vunpack.c.l.b16 %v318
    %v1091 = vunpack.c.l.b16 %v319
    %v1092 = vunpack.c.l.b16 %v320
    %v1093 = vunpack.c.l.b16 %v321
    %v1094 = vunpack.c.l.b16 %v322
    %v1095 = vunpack.c.l.b16 %v323
    %v1096 = vunpack.c.l.b16 %v324
    %v1097 = vunpack.c.l.b16 %v325
    %v1098 = vunpack.c.l.b16 %v326
    %v1099 = vunpack.c.l.b16 %v327
    %v1100 = vunpack.c.l.b16 %v328
    %v1101 = vunpack.c.l.b16 %v329
    %v1102 = vunpack.c.l.b16 %v330
    %v1103 = vunpack.c.l.b16 %v331
    %v1104 = vunpack.c.l.b16 %v332
    %v1105 = vunpack.c.l.b16 %v333
    %v1106 = vunpack.c.l.b16 %v334
    %v1107 = vunpack.c.l.b16 %v335
    %v1108 = vunpack.c.l.b16 %v336
    %v1109 = vunpack.c.l.b16 %v337
    %v1110 = vunpack.c.l.b16 %v338
    %v1111 = vunpack.c.l.b16 %v339
    %v1112 = vunpack.c.l.b16 %v340
    %v1113 = vunpack.c.l.b16 %v341
    %v1114 = vunpack.c.l.b16 %v342
    %v1115 = vunpack.c.l.b16 %v343
    %v1116 = vunpack.c.l.b16 %v344
    %v1117 = vunpack.c.l.b16 %v345
    %v1118 = vunpack.c.l.b16 %v346
    %v1119 = vunpack.c.l.b16 %v347
    %v1120 = vunpack.c.l.b16 %v348
    %v1121 = vunpack.c.l.b16 %v349
    %v1122 = vunpack.c.l.b16 %v350
    %v1123 = vunpack.c.l.b16 %v351
    %v1124 = vunpack.c.l.b16 %v352
    %v1125 = vunpack.c.l.b16 %v353
    %v1126 = vunpack.c.l.b16 %v354
    %v1127 = vunpack.c.l.b16 %v355
    %v1128 = vunpack.c.l.b16 %v356
    %v1129 = vunpack.c.l.b16 %v357
    %v1130 = vunpack.c.l.b16 %v358
    %v1131 = vunpack.c.l.b16 %v359
    %v1132 = vunpack.c.l.b16 %v360
    %v1133 = vunpack.c.l.b16 %v361
    %v1134 = vunpack.c.l.b16 %v362
    %v1135 = vunpack.c.l.b16 %v363
    %v1136 = vunpack.c.l.b16 %v364
    %v1137 = vunpack.c.l.b16 %v365
    %v1138 = vunpack.c.l.b16 %v366
    %v1139 = vunpack.c.l.b16 %v367
    %v1140 = vunpack.c.l.b16 %v368
    %v1141 = vunpack.c.l.b16 %v369
    %v1142 = vunpack.c.l.b16 %v370
    %v1143 = vunpack.c.l.b16 %v371
    %v1144 = vunpack.c.l.b16 %v372
    %v1145 = vunpack.c.l.b16 %v373
    %v1146 = vunpack.c.l.b16 %v374
    %v1147 = vunpack.c.l.b16 %v375
    %v1148 = vunpack.c.l.b16 %v376
    %v1149 = vunpack.c.l.b16 %v377
    %v1150 = vunpack.c.l.b16 %v378
    %v1151 = vunpack.c.l.b16 %v379
    %v1152 = vunpack.c.l.b16 %v380
    %v1153 = vunpack.c.l.b16 %v381
    %v1154 = vunpack.c.l.b16 %v382
    %v1155 = vunpack.c.l.b16 %v383
    %v1156 = vunpack.c.l.b16 %v384
    %v1157 = vunpack.c.l.b16 %v385
    %v1158 = vunpack.c.l.b16 %v386
    %v1159 = vunpack.c.l.b16 %v387
    %v1160 = vunpack.c.l.b16 %v388
    %v1161 = vunpack.c.l.b16 %v389
    %v1162 = vunpack.c.l.b16 %v390
    %v1163 = vunpack.c.l.b16 %v391
    %v1164 = vunpack.c.l.b16 %v392
    %v1165 = vunpack.c.l.b16 %v393
    %v1166 = vunpack.c.l.b16 %v394
    %v1167 = vunpack.c.l.b16 %v395
    %v1168 = vunpack.c.l.b16 %v396
    %v1169 = vunpack.c.l.b16 %v397
    %v1170 = vunpack.c.l.b16 %v398
    %v1171 = vunpack.c.l.b16 %v399
    %v1172 = vunpack.c.l.b16 %v400
    %v1173 = vunpack.c.l.b16 %v401
    %v1174 = vunpack.c.l.b16 %v402
    %v1175 = vunpack.c.l.b16 %v403
    %v1176 = vunpack.c.l.b16 %v404
    %v1177 = vunpack.c.l.b16 %v405
    %v1178 = vunpack.c.l.b16 %v406
    %v1179 = vunpack.c.l.b16 %v407
    %v1180 = vunpack.c.l.b16 %v408
    %v1181 = vunpack.c.l.b16 %v409
    %v1182 = vunpack.c.l.b16 %v410
    %v1183 = vunpack.c.l.b16 %v411
    %v1184 = vunpack.c.l.b16 %v412
    %v1185 = vunpack.c.l.b16 %v413
    %v1186 = vunpack.c.l.b16 %v414
    %v1187 = vunpack.c.l.b16 %v415
    %v1188 = vunpack.c.l.b16 %v416
    %v1189 = vunpack.c.l.b16 %v417
    %v1190 = vunpack.c.l.b16 %v418
    %v1191 = vunpack.c.l.b16 %v419
    %v1192 = vunpack.c.l.b16 %v420
    %v1193 = vunpack.c.l.b16 %v421
    %v1194 = vunpack.c.l.b16 %v422
    %v1195 = vunpack.c.l.b16 %v423
    %v1196 = vunpack.c.l.b16 %v424
    %v1197 = vunpack.c.l.b16 %v425
    %v1198 = vunpack.c.l.b16 %v426
    %v1199 = vunpack.c.l.b16 %v427
    %v1200 = vunpack.c.l.b16 %v428
    %v1201 = vunpack.c.l.b16 %v429
    %v1202 = vunpack.c.l.b16 %v430
    %v1203 = vunpack.c.l.b16 %v431
    %v1204 = vunpack.c.l.b16 %v432
    %v1205 = vunpack.c.l.b16 %v433
    %v1206 = vunpack.c.l.b16 %v434
    %v1207 = vunpack.c.l.b16 %v435
    %v1208 = vunpack.c.l.b16 %v436
    %v1209 = vunpack.c.l.b16 %v437
    %v1210 = vunpack.c.l.b16 %v438
    %v1211 = vunpack.c.l.b16 %v439
    %v1212 = vunpack.c.l.b16 %v440
    %v1213 = vunpack.c.l.b16 %v441
    %v1214 = vunpack.c.l.b16 %v442
    %v1215 = vunpack.c.l.b16 %v443
    %v1216 = vunpack.c.l.b16 %v444
    %v1217 = vunpack.c.l.b16 %v445
    %v1218 = vunpack.c.l.b16 %v446
    %v1219 = vunpack.c.l.b16 %v447
    %v1220 = vunpack.c.l.b16 %v448
    %v1221 = vunpack.c.l.b16 %v449
    %v1222 = vunpack.c.l.b16 %v450
    %v1223 = vunpack.c.l.b16 %v451
    %v1224 = vunpack.c.l.b16 %v452
    %v1225 = vunpack.c.l.b16 %v453
    %v1226 = vunpack.c.l.b16 %v454
    %v1227 = vunpack.c.l.b16 %v455
    %v1228 = vunpack.c.l.b16 %v456
    %v1229 = vunpack.c.l.b16 %v457
    %v1230 = vunpack.c.l.b16 %v458
    %v1231 = vunpack.c.l.b16 %v459
    %v1232 = vunpack.c.l.b16 %v460
    %v1233 = vunpack.c.l.b16 %v461
    %v1234 = vunpack.c.l.b16 %v462
    %v1235 = vunpack.c.l.b16 %v463
    %v1236 = vunpack.c.l.b16 %v464
    %v1237 = vunpack.c.l.b16 %v465
    %v1238 = vunpack.c.l.b16 %v466
    %v1239 = vunpack.c.l.b16 %v467
    %v1240 = vunpack.c.l.b16 %v468
    %v1241 = vunpack.c.l.b16 %v469
    %v1242 = vunpack.c.l.b16 %v470
    %v1243 = vunpack.c.l.b16 %v471
    %v1244 = vunpack.c.l.b16 %v472
    %v1245 = vunpack.c.l.b16 %v473
    %v1246 = vunpack.c.l.b16 %v474
    %v1247 = vunpack.c.l.b16 %v475
    %v1248 = vunpack.c.l.b16 %v476
    %v1249 = vunpack.c.l.b16 %v477
    %v1250 = vunpack.c.l.b16 %v478
    %v1251 = vunpack.c.l.b16 %v479
    %v1252 = vunpack.c.l.b16 %v480
    %v1253 = vunpack.c.l.b16 %v481
    %v1254 = vunpack.c.l.b16 %v482
    %v1255 = vunpack.c.l.b16 %v483
    %v1256 = vunpack.c.l.b16 %v484
    %v1257 = vunpack.c.l.b16 %v485
    %v1258 = vunpack.c.l.b16 %v486
    %v1259 = vunpack.c.l.b16 %v487
    %v1260 = vunpack.c.l.b16 %v488
    %v1261 = vunpack.c.l.b16 %v489
    %v1262 = vunpack.c.l.b16 %v490
    %v1263 = vunpack.c.l.b16 %v491
    %v1264 = vunpack.c.l.b16 %v492
    %v1265 = vunpack.c.l.b16 %v493
    %v1266 = vunpack.c.l.b16 %v494
    %v1267 = vunpack.c.l.b16 %v495
    %v1268 = vunpack.c.l.b16 %v496
    %v1269 = vunpack.c.l.b16 %v497
    %v1270 = vunpack.c.l.b16 %v498
    %v1271 = vunpack.c.l.b16 %v499
    %v1272 = vunpack.c.l.b16 %v500
    %v1273 = vunpack.c.l.b16 %v501
    %v1274 = vunpack.c.l.b16 %v502
    %v1275 = vunpack.c.l.b16 %v503
    %v1276 = vunpack.c.l.b16 %v504
    %v1277 = vunpack.c.l.b16 %v505
    %v1278 = vunpack.c.l.b16 %v506
    %v1279 = vunpack.c.l.b16 %v507
    %v1280 = vunpack.c.l.b16 %v508
    %v1281 = vunpack.c.l.b16 %v509
    %v1282 = vunpack.c.l.b16 %v510
    %v1283 = vunpack.c.l.b16 %v511
    %v1284 = vunpack.c.l.b16 %v512
    %v1285 = vunpack.c.l.b16 %v513
    %v1286 = vunpack.c.l.b16 %v514
    %v1287 = vunpack.c.l.b16 %v515
    %v1288 = vunpack.c.l.b16 %v516
    %v1289 = vunpack.c.l.b16 %v517
    %v1290 = vunpack.c.l.b16 %v518
    %v1291 = vunpack.c.l.b16 %v519
    %v1292 = vpack.c.b16 %v909, %v908
    %v1293 = vpack.c.b16 %v911, %v910
    %v1294 = vpack.c.b16 %v913, %v912
    %v1295 = vpack.c.b16 %v915, %v914
    %v1296 = vpack.c.b16 %v917, %v916
    %v1297 = vpack.c.b16 %v919, %v918
    %v1298 = vpack.c.b16 %v921, %v920
    %v1299 = vpack.c.b16 %v923, %v922
    %v1300 = vpack.c.b16 %v925, %v924
    %v1301 = vpack.c.b16 %v927, %v926
    %v1302 = vpack.c.b16 %v929, %v928
    %v1303 = vpack.c.b16 %v931, %v930
    %v1304 = vpack.c.b16 %v933, %v932
    %v1305 = vpack.c.b16 %v935, %v934
    %v1306 = vpack.c.b16 %v937, %v936
    %v1307 = vpack.c.b16 %v939, %v938
    %v1308 = vpack.c.b16 %v941, %v940
    %v1309 = vpack.c.b16 %v943, %v942
    %v1310 = vpack.c.b16 %v945, %v944
    %v1311 = vpack.c.b16 %v947, %v946
    %v1312 = vpack.c.b16 %v949, %v948
    %v1313 = vpack.c.b16 %v951, %v950
    %v1314 = vpack.c.b16 %v953, %v952
    %v1315 = vpack.c.b16 %v955, %v954
    %v1316 = vpack.c.b16 %v957, %v956
    %v1317 = vpack.c.b16 %v959, %v958
    %v1318 = vpack.c.b16 %v961, %v960
    %v1319 = vpack.c.b16 %v963, %v962
    %v1320 = vpack.c.b16 %v965, %v964
    %v1321 = vpack.c.b16 %v967, %v966
    %v1322 = vpack.c.b16 %v969, %v968
    %v1323 = vpack.c.b16 %v971, %v970
    %v1324 = vpack.c.b16 %v973, %v972
    %v1325 = vpack.c.b16 %v975, %v974
    %v1326 = vpack.c.b16 %v977, %v976
    %v1327 = vpack.c.b16 %v979, %v978
    %v1328 = vpack.c.b16 %v981, %v980
    %v1329 = vpack.c.b16 %v983, %v982
    %v1330 = vpack.c.b16 %v985, %v984
    %v1331 = vpack.c.b16 %v987, %v986
    %v1332 = vpack.c.b16 %v989, %v988
    %v1333 = vpack.c.b16 %v991, %v990
    %v1334 = vpack.c.b16 %v993, %v992
    %v1335 = vpack.c.b16 %v995, %v994
    %v1336 = vpack.c.b16 %v997, %v996
    %v1337 = vpack.c.b16 %v999, %v998
    %v1338 = vpack.c.b16 %v1001, %v1000
    %v1339 = vpack.c.b16 %v1003, %v1002
    %v1340 = vpack.c.b16 %v1005, %v1004
    %v1341 = vpack.c.b16 %v1007, %v1006
    %v1342 = vpack.c.b16 %v1009, %v1008
    %v1343 = vpack.c.b16 %v1011, %v1010
    %v1344 = vpack.c.b16 %v1013, %v1012
    %v1345 = vpack.c.b16 %v1015, %v1014
    %v1346 = vpack.c.b16 %v1017, %v1016
    %v1347 = vpack.c.b16 %v1019, %v1018
    %v1348 = vpack.c.b16 %v1021, %v1020
    %v1349 = vpack.c.b16 %v1023, %v1022
    %v1350 = vpack.c.b16 %v1025, %v1024
    %v1351 = vpack.c.b16 %v1027, %v1026
    %v1352 = vpack.c.b16 %v1029, %v1028
    %v1353 = vpack.c.b16 %v1031, %v1030
    %v1354 = vpack.c.b16 %v1033, %v1032
    %v1355 = vpack.c.b16 %v1035, %v1034
    %v1356 = vpack.c.b16 %v1037, %v1036
    %v1357 = vpack.c.b16 %v1039, %v1038
    %v1358 = vpack.c.b16 %v1041, %v1040
    %v1359 = vpack.c.b16 %v1043, %v1042
    %v1360 = vpack.c.b16 %v1045, %v1044
    %v1361 = vpack.c.b16 %v1047, %v1046
    %v1362 = vpack.c.b16 %v1049, %v1048
    %v1363 = vpack.c.b16 %v1051, %v1050
    %v1364 = vpack.c.b16 %v1053, %v1052
    %v1365 = vpack.c.b16 %v1055, %v1054
    %v1366 = vpack.c.b16 %v1057, %v1056
    %v1367 = vpack.c.b16 %v1059, %v1058
    %v1368 = vpack.c.b16 %v1061, %v1060
    %v1369 = vpack.c.b16 %v1063, %v1062
    %v1370 = vpack.c.b16 %v1065, %v1064
    %v1371 = vpack.c.b16 %v1067, %v1066
    %v1372 = vpack.c.b16 %v1069, %v1068
    %v1373 = vpack.c.b16 %v1071, %v1070
    %v1374 = vpack.c.b16 %v1073, %v1072
    %v1375 = vpack.c.b16 %v1075, %v1074
    %v1376 = vpack.c.b16 %v1077, %v1076
    %v1377 = vpack.c.b16 %v1079, %v1078
    %v1378 = vpack.c.b16 %v1081, %v1080
    %v1379 = vpack.c.b16 %v1083, %v1082
    %v1380 = vpack.c.b16 %v1085, %v1084
    %v1381 = vpack.c.b16 %v1087, %v1086
    %v1382 = vpack.c.b16 %v1089, %v1088
    %v1383 = vpack.c.b16 %v1091, %v1090
    %v1384 = vpack.c.b16 %v1093, %v1092
    %v1385 = vpack.c.b16 %v1095, %v1094
    %v1386 = vpack.c.b16 %v1097, %v1096
    %v1387 = vpack.c.b16 %v1099, %v1098
    %v1388 = vpack.c.b16 %v1101, %v1100
    %v1389 = vpack.c.b16 %v1103, %v1102
    %v1390 = vpack.c.b16 %v1105, %v1104
    %v1391 = vpack.c.b16 %v1107, %v1106
    %v1392 = vpack.c.b16 %v1109, %v1108
    %v1393 = vpack.c.b16 %v1111, %v1110
    %v1394 = vpack.c.b16 %v1113, %v1112
    %v1395 = vpack.c.b16 %v1115, %v1114
    %v1396 = vpack.c.b16 %v1117, %v1116
    %v1397 = vpack.c.b16 %v1119, %v1118
    %v1398 = vpack.c.b16 %v1121, %v1120
    %v1399 = vpack.c.b16 %v1123, %v1122
    %v1400 = vpack.c.b16 %v1125, %v1124
    %v1401 = vpack.c.b16 %v1127, %v1126
    %v1402 = vpack.c.b16 %v1129, %v1128
    %v1403 = vpack.c.b16 %v1131, %v1130
    %v1404 = vpack.c.b16 %v1133, %v1132
    %v1405 = vpack.c.b16 %v1135, %v1134
    %v1406 = vpack.c.b16 %v1137, %v1136
    %v1407 = vpack.c.b16 %v1139, %v1138
    %v1408 = vpack.c.b16 %v1141, %v1140
    %v1409 = vpack.c.b16 %v1143, %v1142
    %v1410 = vpack.c.b16 %v1145, %v1144
    %v1411 = vpack.c.b16 %v1147, %v1146
    %v1412 = vpack.c.b16 %v1149, %v1148
    %v1413 = vpack.c.b16 %v1151, %v1150
    %v1414 = vpack.c.b16 %v1153, %v1152
    %v1415 = vpack.c.b16 %v1155, %v1154
    %v1416 = vpack.c.b16 %v1157, %v1156
    %v1417 = vpack.c.b16 %v1159, %v1158
    %v1418 = vpack.c.b16 %v1161, %v1160
    %v1419 = vpack.c.b16 %v1163, %v1162
    %v1420 = vpack.c.b16 %v1165, %v1164
    %v1421 = vpack.c.b16 %v1167, %v1166
    %v1422 = vpack.c.b16 %v1169, %v1168
    %v1423 = vpack.c.b16 %v1171, %v1170
    %v1424 = vpack.c.b16 %v1173, %v1172
    %v1425 = vpack.c.b16 %v1175, %v1174
    %v1426 = vpack.c.b16 %v1177, %v1176
    %v1427 = vpack.c.b16 %v1179, %v1178
    %v1428 = vpack.c.b16 %v1181, %v1180
    %v1429 = vpack.c.b16 %v1183, %v1182
    %v1430 = vpack.c.b16 %v1185, %v1184
    %v1431 = vpack.c.b16 %v1187, %v1186
    %v1432 = vpack.c.b16 %v1189, %v1188
    %v1433 = vpack.c.b16 %v1191, %v1190
    %v1434 = vpack.c.b16 %v1193, %v1192
    %v1435 = vpack.c.b16 %v1195, %v1194
    %v1436 = vpack.c.b16 %v1197, %v1196
    %v1437 = vpack.c.b16 %v1199, %v1198
    %v1438 = vpack.c.b16 %v1201, %v1200
    %v1439 = vpack.c.b16 %v1203, %v1202
    %v1440 = vpack.c.b16 %v1205, %v1204
    %v1441 = vpack.c.b16 %v1207, %v1206
    %v1442 = vpack.c.b16 %v1209, %v1208
    %v1443 = vpack.c.b16 %v1211, %v1210
    %v1444 = vpack.c.b16 %v1213, %v1212
    %v1445 = vpack.c.b16 %v1215, %v1214
    %v1446 = vpack.c.b16 %v1217, %v1216
    %v1447 = vpack.c.b16 %v1219, %v1218
    %v1448 = vpack.c.b16 %v1221, %v1220
    %v1449 = vpack.c.b16 %v1223, %v1222
    %v1450 = vpack.c.b16 %v1225, %v1224
    %v1451 = vpack.c.b16 %v1227, %v1226
    %v1452 = vpack.c.b16 %v1229, %v1228
    %v1453 = vpack.c.b16 %v1231, %v1230
    %v1454 = vpack.c.b16 %v1233, %v1232
    %v1455 = vpack.c.b16 %v1235, %v1234
    %v1456 = vpack.c.b16 %v1237, %v1236
    %v1457 = vpack.c.b16 %v1239, %v1238
    %v1458 = vpack.c.b16 %v1241, %v1240
    %v1459 = vpack.c.b16 %v1243, %v1242
    %v1460 = vpack.c.b16 %v1245, %v1244
    %v1461 = vpack.c.b16 %v1247, %v1246
    %v1462 = vpack.c.b16 %v1249, %v1248
    %v1463 = vpack.c.b16 %v1251, %v1250
    %v1464 = vpack.c.b16 %v1253, %v1252
    %v1465 = vpack.c.b16 %v1255, %v1254
    %v1466 = vpack.c.b16 %v1257, %v1256
    %v1467 = vpack.c.b16 %v1259, %v1258
    %v1468 = vpack.c.b16 %v1261, %v1260
    %v1469 = vpack.c.b16 %v1263, %v1262
    %v1470 = vpack.c.b16 %v1265, %v1264
    %v1471 = vpack.c.b16 %v1267, %v1266
    %v1472 = vpack.c.b16 %v1269, %v1268
    %v1473 = vpack.c.b16 %v1271, %v1270
    %v1474 = vpack.c.b16 %v1273, %v1272
    %v1475 = vpack.c.b16 %v1275, %v1274
    %v1476 = vpack.c.b16 %v1277, %v1276
    %v1477 = vpack.c.b16 %v1279, %v1278
    %v1478 = vpack.c.b16 %v1281, %v1280
    %v1479 = vpack.c.b16 %v1283, %v1282
    %v1480 = vpack.c.b16 %v1285, %v1284
    %v1481 = vpack.c.b16 %v1287, %v1286
    %v1482 = vpack.c.b16 %v1289, %v1288
    %v1483 = vpack.c.b16 %v1291, %v1290
    %1676 = vmatpush.bf16.msra.mxu0 %v1299
    %1677 = vmatpush.bf16.msra.mxu0 %v1298
    %1678 = vmatpush.bf16.msra.mxu0 %v1297
    %1679 = vmatpush.bf16.msra.mxu0 %v1296
    %1680 = vmatpush.bf16.msra.mxu0 %v1295
    %1681 = vmatpush.bf16.msra.mxu0 %v1294
    %1682 = vmatpush.bf16.msra.mxu0 %v1293
    %1683 = vmatpush.bf16.msra.mxu0 %v1292
    %1684 = vmatmul.bf16.gmra.mxu0 %v112
    %v1685 = vpop.f32.mrf.mxu0
    %v1686 = vadd.f32 %v522, %v1685
    %v1687 = vpop.f32.mrf.mxu0
    %1688 = vdwg.mxu0
    %1689 = vmatpush.bf16.msra.mxu0 %v1307
    %1690 = vmatpush.bf16.msra.mxu0 %v1306
    %1691 = vmatpush.bf16.msra.mxu0 %v1305
    %1692 = vmatpush.bf16.msra.mxu0 %v1304
    %1693 = vmatpush.bf16.msra.mxu0 %v1303
    %1694 = vmatpush.bf16.msra.mxu0 %v1302
    %1695 = vmatpush.bf16.msra.mxu0 %v1301
    %1696 = vmatpush.bf16.msra.mxu0 %v1300
    %1697 = vmatmul.bf16.gmra.mxu0 %v113
    %v1698 = vpop.f32.mrf.mxu0
    %v1699 = vadd.f32 %v1686, %v1698
    %v1700 = vpop.f32.mrf.mxu0
    %1701 = vdwg.mxu0
    %1702 = vmatpush.bf16.msra.mxu0 %v1315
    %1703 = vmatpush.bf16.msra.mxu0 %v1314
    %1704 = vmatpush.bf16.msra.mxu0 %v1313
    %1705 = vmatpush.bf16.msra.mxu0 %v1312
    %1706 = vmatpush.bf16.msra.mxu0 %v1311
    %1707 = vmatpush.bf16.msra.mxu0 %v1310
    %1708 = vmatpush.bf16.msra.mxu0 %v1309
    %1709 = vmatpush.bf16.msra.mxu0 %v1308
    %1710 = vmatmul.bf16.gmra.mxu0 %v114
    %v1711 = vpop.f32.mrf.mxu0
    %v1712 = vadd.f32 %v1699, %v1711
    %v1713 = vpop.f32.mrf.mxu0
    %1714 = vdwg.mxu0
    %1715 = vmatpush.bf16.msra.mxu0 %v1323
    %1716 = vmatpush.bf16.msra.mxu0 %v1322
    %1717 = vmatpush.bf16.msra.mxu0 %v1321
    %1718 = vmatpush.bf16.msra.mxu0 %v1320
    %1719 = vmatpush.bf16.msra.mxu0 %v1319
    %1720 = vmatpush.bf16.msra.mxu0 %v1318
    %1721 = vmatpush.bf16.msra.mxu0 %v1317
    %1722 = vmatpush.bf16.msra.mxu0 %v1316
    %1723 = vmatmul.bf16.gmra.mxu0 %v115
    %v1724 = vpop.f32.mrf.mxu0
    %v1725 = vadd.f32 %v1712, %v1724
    %v1726 = vpop.f32.mrf.mxu0
    %1727 = vdwg.mxu0
    %1728 = vmatpush.bf16.msra.mxu0 %v1331
    %1729 = vmatpush.bf16.msra.mxu0 %v1330
    %1730 = vmatpush.bf16.msra.mxu0 %v1329
    %1731 = vmatpush.bf16.msra.mxu0 %v1328
    %1732 = vmatpush.bf16.msra.mxu0 %v1327
    %1733 = vmatpush.bf16.msra.mxu0 %v1326
    %1734 = vmatpush.bf16.msra.mxu0 %v1325
    %1735 = vmatpush.bf16.msra.mxu0 %v1324
    %1736 = vmatmul.bf16.gmra.mxu0 %v116
    %v1737 = vpop.f32.mrf.mxu0
    %v1738 = vadd.f32 %v1725, %v1737
    %v1739 = vpop.f32.mrf.mxu0
    %1740 = vdwg.mxu0
    %1741 = vmatpush.bf16.msra.mxu0 %v1339
    %1742 = vmatpush.bf16.msra.mxu0 %v1338
    %1743 = vmatpush.bf16.msra.mxu0 %v1337
    %1744 = vmatpush.bf16.msra.mxu0 %v1336
    %1745 = vmatpush.bf16.msra.mxu0 %v1335
    %1746 = vmatpush.bf16.msra.mxu0 %v1334
    %1747 = vmatpush.bf16.msra.mxu0 %v1333
    %1748 = vmatpush.bf16.msra.mxu0 %v1332
    %1749 = vmatmul.bf16.gmra.mxu0 %v117
    %v1750 = vpop.f32.mrf.mxu0
    %v1751 = vadd.f32 %v1738, %v1750
    %v1752 = vpop.f32.mrf.mxu0
    %1753 = vdwg.mxu0
    %1754 = vmatpush.bf16.msra.mxu0 %v1347
    %1755 = vmatpush.bf16.msra.mxu0 %v1346
    %1756 = vmatpush.bf16.msra.mxu0 %v1345
    %1757 = vmatpush.bf16.msra.mxu0 %v1344
    %1758 = vmatpush.bf16.msra.mxu0 %v1343
    %1759 = vmatpush.bf16.msra.mxu0 %v1342
    %1760 = vmatpush.bf16.msra.mxu0 %v1341
    %1761 = vmatpush.bf16.msra.mxu0 %v1340
    %1762 = vmatmul.bf16.gmra.mxu0 %v118
    %v1763 = vpop.f32.mrf.mxu0
    %v1764 = vadd.f32 %v1751, %v1763
    %v1765 = vpop.f32.mrf.mxu0
    %1766 = vdwg.mxu0
    %1767 = vmatpush.bf16.msra.mxu0 %v1355
    %1768 = vmatpush.bf16.msra.mxu0 %v1354
    %1769 = vmatpush.bf16.msra.mxu0 %v1353
    %1770 = vmatpush.bf16.msra.mxu0 %v1352
    %1771 = vmatpush.bf16.msra.mxu0 %v1351
    %1772 = vmatpush.bf16.msra.mxu0 %v1350
    %1773 = vmatpush.bf16.msra.mxu0 %v1349
    %1774 = vmatpush.bf16.msra.mxu0 %v1348
    %1775 = vmatmul.bf16.gmra.mxu0 %v119
    %v1776 = vpop.f32.mrf.mxu0
    %v1777 = vadd.f32 %v1764, %v1776
    %v1778 = vpop.f32.mrf.mxu0
    %1779 = vdwg.mxu0
    %1780 = vmatpush.bf16.msra.mxu0 %v1363
    %1781 = vmatpush.bf16.msra.mxu0 %v1362
    %1782 = vmatpush.bf16.msra.mxu0 %v1361
    %1783 = vmatpush.bf16.msra.mxu0 %v1360
    %1784 = vmatpush.bf16.msra.mxu0 %v1359
    %1785 = vmatpush.bf16.msra.mxu0 %v1358
    %1786 = vmatpush.bf16.msra.mxu0 %v1357
    %1787 = vmatpush.bf16.msra.mxu0 %v1356
    %1788 = vmatmul.bf16.gmra.mxu0 %v120
    %v1789 = vpop.f32.mrf.mxu0
    %v1790 = vadd.f32 %v1777, %v1789
    %v1791 = vpop.f32.mrf.mxu0
    %1792 = vdwg.mxu0
    %1793 = vmatpush.bf16.msra.mxu0 %v1371
    %1794 = vmatpush.bf16.msra.mxu0 %v1370
    %1795 = vmatpush.bf16.msra.mxu0 %v1369
    %1796 = vmatpush.bf16.msra.mxu0 %v1368
    %1797 = vmatpush.bf16.msra.mxu0 %v1367
    %1798 = vmatpush.bf16.msra.mxu0 %v1366
    %1799 = vmatpush.bf16.msra.mxu0 %v1365
    %1800 = vmatpush.bf16.msra.mxu0 %v1364
    %1801 = vmatmul.bf16.gmra.mxu0 %v121
    %v1802 = vpop.f32.mrf.mxu0
    %v1803 = vadd.f32 %v1790, %v1802
    %v1804 = vpop.f32.mrf.mxu0
    %1805 = vdwg.mxu0
    %1806 = vmatpush.bf16.msra.mxu0 %v1379
    %1807 = vmatpush.bf16.msra.mxu0 %v1378
    %1808 = vmatpush.bf16.msra.mxu0 %v1377
    %1809 = vmatpush.bf16.msra.mxu0 %v1376
    %1810 = vmatpush.bf16.msra.mxu0 %v1375
    %1811 = vmatpush.bf16.msra.mxu0 %v1374
    %1812 = vmatpush.bf16.msra.mxu0 %v1373
    %1813 = vmatpush.bf16.msra.mxu0 %v1372
    %1814 = vmatmul.bf16.gmra.mxu0 %v122
    %v1815 = vpop.f32.mrf.mxu0
    %v1816 = vadd.f32 %v1803, %v1815
    %v1817 = vpop.f32.mrf.mxu0
    %1818 = vdwg.mxu0
    %1819 = vmatpush.bf16.msra.mxu0 %v1387
    %1820 = vmatpush.bf16.msra.mxu0 %v1386
    %1821 = vmatpush.bf16.msra.mxu0 %v1385
    %1822 = vmatpush.bf16.msra.mxu0 %v1384
    %1823 = vmatpush.bf16.msra.mxu0 %v1383
    %1824 = vmatpush.bf16.msra.mxu0 %v1382
    %1825 = vmatpush.bf16.msra.mxu0 %v1381
    %1826 = vmatpush.bf16.msra.mxu0 %v1380
    %1827 = vmatmul.bf16.gmra.mxu0 %v123
    %v1828 = vpop.f32.mrf.mxu0
    %v1829 = vadd.f32 %v1816, %v1828
    %v1830 = vpop.f32.mrf.mxu0
    %1831 = vdwg.mxu0
    %1832 = vmatpush.bf16.msra.mxu0 %v1395
    %1833 = vmatpush.bf16.msra.mxu0 %v1394
    %1834 = vmatpush.bf16.msra.mxu0 %v1393
    %1835 = vmatpush.bf16.msra.mxu0 %v1392
    %1836 = vmatpush.bf16.msra.mxu0 %v1391
    %1837 = vmatpush.bf16.msra.mxu0 %v1390
    %1838 = vmatpush.bf16.msra.mxu0 %v1389
    %1839 = vmatpush.bf16.msra.mxu0 %v1388
    %1840 = vmatmul.bf16.gmra.mxu0 %v124
    %v1841 = vpop.f32.mrf.mxu0
    %v1842 = vadd.f32 %v1829, %v1841
    %v1843 = vpop.f32.mrf.mxu0
    %1844 = vdwg.mxu0
    %1845 = vmatpush.bf16.msra.mxu0 %v1403
    %1846 = vmatpush.bf16.msra.mxu0 %v1402
    %1847 = vmatpush.bf16.msra.mxu0 %v1401
    %1848 = vmatpush.bf16.msra.mxu0 %v1400
    %1849 = vmatpush.bf16.msra.mxu0 %v1399
    %1850 = vmatpush.bf16.msra.mxu0 %v1398
    %1851 = vmatpush.bf16.msra.mxu0 %v1397
    %1852 = vmatpush.bf16.msra.mxu0 %v1396
    %1853 = vmatmul.bf16.gmra.mxu0 %v125
    %v1854 = vpop.f32.mrf.mxu0
    %v1855 = vadd.f32 %v1842, %v1854
    %v1856 = vpop.f32.mrf.mxu0
    %1857 = vdwg.mxu0
    %1858 = vmatpush.bf16.msra.mxu0 %v1411
    %1859 = vmatpush.bf16.msra.mxu0 %v1410
    %1860 = vmatpush.bf16.msra.mxu0 %v1409
    %1861 = vmatpush.bf16.msra.mxu0 %v1408
    %1862 = vmatpush.bf16.msra.mxu0 %v1407
    %1863 = vmatpush.bf16.msra.mxu0 %v1406
    %1864 = vmatpush.bf16.msra.mxu0 %v1405
    %1865 = vmatpush.bf16.msra.mxu0 %v1404
    %1866 = vmatmul.bf16.gmra.mxu0 %v126
    %v1867 = vpop.f32.mrf.mxu0
    %v1868 = vadd.f32 %v1855, %v1867
    %v1869 = vpop.f32.mrf.mxu0
    %1870 = vdwg.mxu0
    %1871 = vmatpush.bf16.msra.mxu0 %v1419
    %1872 = vmatpush.bf16.msra.mxu0 %v1418
    %1873 = vmatpush.bf16.msra.mxu0 %v1417
    %1874 = vmatpush.bf16.msra.mxu0 %v1416
    %1875 = vmatpush.bf16.msra.mxu0 %v1415
    %1876 = vmatpush.bf16.msra.mxu0 %v1414
    %1877 = vmatpush.bf16.msra.mxu0 %v1413
    %1878 = vmatpush.bf16.msra.mxu0 %v1412
    %1879 = vmatmul.bf16.gmra.mxu0 %v127
    %v1880 = vpop.f32.mrf.mxu0
    %v1881 = vadd.f32 %v1868, %v1880
    %v1882 = vpop.f32.mrf.mxu0
    %1883 = vdwg.mxu0
    %1884 = vmatpush.bf16.msra.mxu0 %v1427
    %1885 = vmatpush.bf16.msra.mxu0 %v1426
    %1886 = vmatpush.bf16.msra.mxu0 %v1425
    %1887 = vmatpush.bf16.msra.mxu0 %v1424
    %1888 = vmatpush.bf16.msra.mxu0 %v1423
    %1889 = vmatpush.bf16.msra.mxu0 %v1422
    %1890 = vmatpush.bf16.msra.mxu0 %v1421
    %1891 = vmatpush.bf16.msra.mxu0 %v1420
    %1892 = vmatmul.bf16.gmra.mxu0 %v128
    %v1893 = vpop.f32.mrf.mxu0
    %v1894 = vadd.f32 %v1881, %v1893
    %v1895 = vpop.f32.mrf.mxu0
    %1896 = vdwg.mxu0
    %1897 = vmatpush.bf16.msra.mxu0 %v1435
    %1898 = vmatpush.bf16.msra.mxu0 %v1434
    %1899 = vmatpush.bf16.msra.mxu0 %v1433
    %1900 = vmatpush.bf16.msra.mxu0 %v1432
    %1901 = vmatpush.bf16.msra.mxu0 %v1431
    %1902 = vmatpush.bf16.msra.mxu0 %v1430
    %1903 = vmatpush.bf16.msra.mxu0 %v1429
    %1904 = vmatpush.bf16.msra.mxu0 %v1428
    %1905 = vmatmul.bf16.gmra.mxu0 %v129
    %v1906 = vpop.f32.mrf.mxu0
    %v1907 = vadd.f32 %v1894, %v1906
    %v1908 = vpop.f32.mrf.mxu0
    %1909 = vdwg.mxu0
    %1910 = vmatpush.bf16.msra.mxu0 %v1443
    %1911 = vmatpush.bf16.msra.mxu0 %v1442
    %1912 = vmatpush.bf16.msra.mxu0 %v1441
    %1913 = vmatpush.bf16.msra.mxu0 %v1440
    %1914 = vmatpush.bf16.msra.mxu0 %v1439
    %1915 = vmatpush.bf16.msra.mxu0 %v1438
    %1916 = vmatpush.bf16.msra.mxu0 %v1437
    %1917 = vmatpush.bf16.msra.mxu0 %v1436
    %1918 = vmatmul.bf16.gmra.mxu0 %v130
    %v1919 = vpop.f32.mrf.mxu0
    %v1920 = vadd.f32 %v1907, %v1919
    %v1921 = vpop.f32.mrf.mxu0
    %1922 = vdwg.mxu0
    %1923 = vmatpush.bf16.msra.mxu0 %v1451
    %1924 = vmatpush.bf16.msra.mxu0 %v1450
    %1925 = vmatpush.bf16.msra.mxu0 %v1449
    %1926 = vmatpush.bf16.msra.mxu0 %v1448
    %1927 = vmatpush.bf16.msra.mxu0 %v1447
    %1928 = vmatpush.bf16.msra.mxu0 %v1446
    %1929 = vmatpush.bf16.msra.mxu0 %v1445
    %1930 = vmatpush.bf16.msra.mxu0 %v1444
    %1931 = vmatmul.bf16.gmra.mxu0 %v131
    %v1932 = vpop.f32.mrf.mxu0
    %v1933 = vadd.f32 %v1920, %v1932
    %v1934 = vpop.f32.mrf.mxu0
    %1935 = vdwg.mxu0
    %1936 = vmatpush.bf16.msra.mxu0 %v1459
    %1937 = vmatpush.bf16.msra.mxu0 %v1458
    %1938 = vmatpush.bf16.msra.mxu0 %v1457
    %1939 = vmatpush.bf16.msra.mxu0 %v1456
    %1940 = vmatpush.bf16.msra.mxu0 %v1455
    %1941 = vmatpush.bf16.msra.mxu0 %v1454
    %1942 = vmatpush.bf16.msra.mxu0 %v1453
    %1943 = vmatpush.bf16.msra.mxu0 %v1452
    %1944 = vmatmul.bf16.gmra.mxu0 %v132
    %v1945 = vpop.f32.mrf.mxu0
    %v1946 = vadd.f32 %v1933, %v1945
    %v1947 = vpop.f32.mrf.mxu0
    %1948 = vdwg.mxu0
    %1949 = vmatpush.bf16.msra.mxu0 %v1467
    %1950 = vmatpush.bf16.msra.mxu0 %v1466
    %1951 = vmatpush.bf16.msra.mxu0 %v1465
    %1952 = vmatpush.bf16.msra.mxu0 %v1464
    %1953 = vmatpush.bf16.msra.mxu0 %v1463
    %1954 = vmatpush.bf16.msra.mxu0 %v1462
    %1955 = vmatpush.bf16.msra.mxu0 %v1461
    %1956 = vmatpush.bf16.msra.mxu0 %v1460
    %1957 = vmatmul.bf16.gmra.mxu0 %v133
    %v1958 = vpop.f32.mrf.mxu0
    %v1959 = vadd.f32 %v1946, %v1958
    %v1960 = vpop.f32.mrf.mxu0
    %1961 = vdwg.mxu0
    %1962 = vmatpush.bf16.msra.mxu0 %v1475
    %1963 = vmatpush.bf16.msra.mxu0 %v1474
    %1964 = vmatpush.bf16.msra.mxu0 %v1473
    %1965 = vmatpush.bf16.msra.mxu0 %v1472
    %1966 = vmatpush.bf16.msra.mxu0 %v1471
    %1967 = vmatpush.bf16.msra.mxu0 %v1470
    %1968 = vmatpush.bf16.msra.mxu0 %v1469
    %1969 = vmatpush.bf16.msra.mxu0 %v1468
    %1970 = vmatmul.bf16.gmra.mxu0 %v134
    %v1971 = vpop.f32.mrf.mxu0
    %v1972 = vadd.f32 %v1959, %v1971
    %v1973 = vpop.f32.mrf.mxu0
    %1974 = vdwg.mxu0
    %1975 = vmatpush.bf16.msra.mxu0 %v1483
    %1976 = vmatpush.bf16.msra.mxu0 %v1482
    %1977 = vmatpush.bf16.msra.mxu0 %v1481
    %1978 = vmatpush.bf16.msra.mxu0 %v1480
    %1979 = vmatpush.bf16.msra.mxu0 %v1479
    %1980 = vmatpush.bf16.msra.mxu0 %v1478
    %1981 = vmatpush.bf16.msra.mxu0 %v1477
    %1982 = vmatpush.bf16.msra.mxu0 %v1476
    %1983 = vmatmul.bf16.gmra.mxu0 %v135
    %v1984 = vpop.f32.mrf.mxu0
    %v1985 = vadd.f32 %v1972, %v1984
    %v1986 = vpop.f32.mrf.mxu0
    %1987 = vdwg.mxu0
    %1988 = vst [vmem:[#allocation7] sm:$0x3] %v1985
    // Predicated region
    $region22: #{tpu_custom_call.1} parent=1 // pred_check
      _
    $region23: #{tpu_custom_call.1} parent=1 // pred_check_branch
      %1990 = sbr.rel (0) target = $region25
    $region24: #{tpu_custom_call.1} parent=1 // pred_region
      %1992 = vsyncadd [#allocation4], 0
      %s1994 = sshll.u32 [#allocation7], 4
      %s1995 = int_to_ptr.vmem [resolvable:$true] %s1994
      %s1996 = sshll.u32 %s3, 4
      %s1997 = int_to_ptr.hbm [resolvable:$true] %s1996
      %1999 = dma.vmem_to_hbm [thread:$0]  %s1995, 32, %s1997, [#allocation4]
    $region25: #{tpu_custom_call.1} parent=1 // pred_fallthru
      _
    // Predicated region
    $region26: #{tpu_custom_call.1} parent=1 // pred_check
      _
    $region27: #{tpu_custom_call.1} parent=1 // pred_check_branch
      %2001 = sbr.rel (0) target = $region29
    $region28: #{tpu_custom_call.1} parent=1 // pred_region
      %2003 = dma.done [#allocation4], 32
    $region29: #{tpu_custom_call.1} parent=1 // pred_fallthru
      _
    %2004 = vsyncpa [#allocation3], 1
    %2005 = vsyncpa [#allocation6], 1
    %2006 = vsyncpa [#allocation4], 1

</llo_original>
